<compile_context>
chip_gen: v5e
topology: v5e:2x2
jax: 0.10.0
libtpu: 0.0.40
codegen_flags: <defaults>
</compile_context>

<pallas_src>
import functools

import jax
import jax.numpy as jnp
import numpy as np
from jax import lax
from jax.experimental import pallas as pl
from jax.experimental.pallas import tpu as pltpu


# ---------------------------------------------------------------------------
# Kernel factory: num_layers x LSTM + Linear head, one batch block per program.
# ---------------------------------------------------------------------------
def make_lstm_kernel(num_layers, T, H, use_bf16_matmul=False):
    mm_dtype = jnp.bfloat16 if use_bf16_matmul else jnp.float32

    def kernel(*refs):
        # refs = (x, [w_ih, w_hh, bias] * L, w_lin, b_lin, out, proj_scratch)
        n_w = 3 * num_layers
        x_ref = refs[0]                    # (T, Bb, D)   time-major input block
        layer_refs = refs[1:1 + n_w]
        wlin_ref = refs[1 + n_w]           # (H, O_pad)
        blin_ref = refs[2 + n_w]           # (1, O_pad)
        out_ref = refs[3 + n_w]            # (T, Bb, O_pad)
        proj_sc = refs[4 + n_w]            # (T, Bb, 4H) f32 VMEM scratch

        Tn, Bb, _ = x_ref.shape

        def ldw(ref):                      # load weight once, cast for the MXU
            return ref[...].astype(mm_dtype)

        def mm(a, w):                      # MXU matmul, f32 accumulation
            return jnp.dot(a.astype(mm_dtype), w,
                           preferred_element_type=jnp.float32)

        w_lin = ldw(wlin_ref)
        b_lin = blin_ref[...]

        for l in range(num_layers):
            first = (l == 0)
            last = (l == num_layers - 1)

            w_hh = ldw(layer_refs[3 * l + 1])            # (H, 4H)
            if first:
                w_ih0 = ldw(layer_refs[0])               # (D, 4H)
                b0 = layer_refs[2][...]                  # (1, 4H)
            if not last:
                w_ih_nxt = ldw(layer_refs[3 * (l + 1)])  # (H, 4H)
                b_nxt = layer_refs[3 * (l + 1) + 2][...]  # (1, 4H)

            h = jnp.zeros((Bb, H), jnp.float32)
            c = jnp.zeros((Bb, H), jnp.float32)

            # Statically unrolled recurrence; the only serial dependency per
            # step is h -> mm(h, w_hh) -> gates -> EUP -> h.  The x-projection
            # (layer 0) / head matmuls are independent and fill MXU slack.
            for t in range(Tn):
                if first:
                    pre = mm(x_ref[t], w_ih0) + b0        # (Bb, 4H)
                else:
                    pre = proj_sc[t]                      # (Bb, 4H), contiguous

                gates = pre + mm(h, w_hh)                 # (Bb, 4H)

                ifo = jax.nn.sigmoid(gates[:, :3 * H])    # (Bb, 3H)  EUP
                g = jnp.tanh(gates[:, 3 * H:])            # (Bb, H)   EUP

                c = ifo[:, H:2 * H] * c + ifo[:, :H] * g
                h = ifo[:, 2 * H:3 * H] * jnp.tanh(c)

                if last:
                    # Fused Linear head: lane-dense (Bb, 128) unmasked store.
                    out_ref[t] = (mm(h, w_lin) + b_lin).astype(out_ref.dtype)
                else:
                    # Fused next-layer input projection: lane-dense scratch
                    # write (replaces the old masked (.,32) h stores).
                    proj_sc[t] = mm(h, w_ih_nxt) + b_nxt

    return kernel


# ---------------------------------------------------------------------------
# Wrapper
# ---------------------------------------------------------------------------
@functools.partial(jax.jit, static_argnames=("block_b", "use_bf16_matmul"))
def lstm_model_forward(x_btd, lstm_params, w_lin, b_lin, *,
                       block_b=256, use_bf16_matmul=False):
    """x_btd: (B, T, D) batch-first.  Returns (B, T, O), matching the module."""
    B, T, D = x_btd.shape
    H = lstm_params[0][1].shape[0]
    O = w_lin.shape[-1]
    num_layers = len(lstm_params)
    O_pad = max(128, pl.cdiv(O, 128) * 128)          # lane-dense padded head

    Bb = min(block_b, B)                             # batch rows per grid step
    n_blk = pl.cdiv(B, Bb)
    B_pad = n_blk * Bb

    # Time-major input: per-step reads inside the kernel become contiguous
    # (Bb, D) planes of the block (transpose/pad are cheap XLA HBM ops).
    x_tbd = jnp.transpose(x_btd, (1, 0, 2))          # (T, B, D)
    if B_pad != B:
        x_tbd = jnp.pad(x_tbd, ((0, 0), (0, B_pad - B), (0, 0)))

    # Zero-pad the Linear head to O_pad columns -> unmasked 128-lane stores.
    w_lin_p = jnp.zeros((H, O_pad), w_lin.dtype).at[:, :O].set(w_lin)
    b_lin_p = jnp.zeros((1, O_pad), b_lin.dtype).at[:, :O].set(
        b_lin.reshape(1, O))

    in_specs = [pl.BlockSpec((T, Bb, D), lambda b: (0, b, 0))]
    flat_weights = []
    for l, (w_ih, w_hh, bias) in enumerate(lstm_params):
        d_in = D if l == 0 else H
        in_specs += [
            pl.BlockSpec((d_in, 4 * H), lambda b: (0, 0)),
            pl.BlockSpec((H, 4 * H), lambda b: (0, 0)),
            pl.BlockSpec((1, 4 * H), lambda b: (0, 0)),
        ]
        flat_weights += [w_ih, w_hh, bias]
    in_specs += [
        pl.BlockSpec((H, O_pad), lambda b: (0, 0)),
        pl.BlockSpec((1, O_pad), lambda b: (0, 0)),
    ]

    out_tbo = pl.pallas_call(
        make_lstm_kernel(num_layers, T, H, use_bf16_matmul),
        out_shape=jax.ShapeDtypeStruct((T, B_pad, O_pad), x_btd.dtype),
        grid=(n_blk,),
        in_specs=in_specs,
        out_specs=pl.BlockSpec((T, Bb, O_pad), lambda b: (0, b, 0)),
        scratch_shapes=[pltpu.VMEM((T, Bb, 4 * H), jnp.float32)],
        compiler_params=pltpu.CompilerParams(
            dimension_semantics=("parallel",),
            vmem_limit_bytes=32 * 1024 * 1024),
    )(x_tbd, *flat_weights, w_lin_p, b_lin_p)

    # Back to batch-first, drop batch padding and the padded output columns.
    return jnp.transpose(out_tbo, (1, 0, 2))[:B, :, :O]


# ---------------------------------------------------------------------------
# Pure-JAX reference (same math, lax.scan) for validation
# ---------------------------------------------------------------------------
def reference_forward(x_btd, lstm_params, w_lin, b_lin):
    B, T, D = x_btd.shape
    seq = x_btd
    for (w_ih, w_hh, bias) in lstm_params:
        H = w_hh.shape[0]

        def step(carry, x_t):
            h, c = carry
            gates = jnp.dot(x_t, w_ih) + jnp.dot(h, w_hh) + bias  # (B, 4H)
            i = jax.nn.sigmoid(gates[:, :H])
            f = jax.nn.sigmoid(gates[:, H:2 * H])
            o = jax.nn.sigmoid(gates[:, 2 * H:3 * H])
            g = jnp.tanh(gates[:, 3 * H:])
            c_new = f * c + i * g
            h_new = o * jnp.tanh(c_new)
            return (h_new, c_new), h_new

        xt = jnp.transpose(seq, (1, 0, 2))                        # (T, B, D)
        init = (jnp.zeros((B, H), jnp.float32), jnp.zeros((B, H), jnp.float32))
        _, hs = lax.scan(step, init, xt)                          # (T, B, H)
        seq = jnp.transpose(hs, (1, 0, 2))                        # (B, T, H)
    return jnp.dot(seq, w_lin) + b_lin                            # (B, T, O)


# ---------------------------------------------------------------------------
# Deterministic parameter construction (PyTorch-like uniform init), packed in
# the kernel layout: W_ih (D, 4H), W_hh (H, 4H), bias (1, 4H) = b_ih + b_hh,
# gate order [i, f, o, g].
# ---------------------------------------------------------------------------
def make_params(key, input_size, hidden_size, num_layers, output_size):
    H = hidden_size
    scale = 1.0 / np.sqrt(H)
    lstm_params = []
    for layer in range(num_layers):
        d_in = input_size if layer == 0 else H
        key, k1, k2, k3 = jax.random.split(key, 4)
        w_ih = jax.random.uniform(k1, (d_in, 4 * H), jnp.float32, -scale, scale)
        w_hh = jax.random.uniform(k2, (H, 4 * H), jnp.float32, -scale, scale)
        bias = jnp.sum(jax.random.uniform(k3, (2, 1, 4 * H), jnp.float32,
                                          -scale, scale), axis=0)
        lstm_params.append((w_ih, w_hh, bias))

    key, k1, k2 = jax.random.split(key, 3)
    w_lin = jax.random.uniform(k1, (H, output_size), jnp.float32, -scale, scale)
    b_lin = jax.random.uniform(k2, (1, output_size), jnp.float32, -scale, scale)
    return lstm_params, w_lin, b_lin


if __name__ == "__main__":
    B, T = 2, 8
    input_size, hidden_size, num_layers, output_size = 16, 32, 2, 4

    key = jax.random.PRNGKey(0)
    key, kx, kp = jax.random.split(key, 3)
    x = jax.random.normal(kx, (B, T, input_size), jnp.float32)

    lstm_params, w_lin, b_lin = make_params(
        kp, input_size, hidden_size, num_layers, output_size)

    out = lstm_model_forward(x, lstm_params, w_lin, b_lin)
    out = jax.block_until_ready(out)

    ref = reference_forward(x, lstm_params, w_lin, b_lin)
    np.testing.assert_allclose(np.asarray(out), np.asarray(ref),
                               rtol=1e-5, atol=2e-5)
    assert out.shape == (B, T, output_size)
    print("KERNEL_OK")
</pallas_src>

<mosaic_0001>
module attributes {stable_mosaic.version = 11 : i64} {
  func.func @kernel(%arg0: i32, %arg1: memref<8x2x16xf32, #tpu.memory_space<vmem>>, %arg2: memref<16x128xf32, #tpu.memory_space<vmem>>, %arg3: memref<32x128xf32, #tpu.memory_space<vmem>>, %arg4: memref<1x128xf32, #tpu.memory_space<vmem>>, %arg5: memref<32x128xf32, #tpu.memory_space<vmem>>, %arg6: memref<32x128xf32, #tpu.memory_space<vmem>>, %arg7: memref<1x128xf32, #tpu.memory_space<vmem>>, %arg8: memref<32x128xf32, #tpu.memory_space<vmem>>, %arg9: memref<1x128xf32, #tpu.memory_space<vmem>>, %arg10: memref<8x2x128xf32, #tpu.memory_space<vmem>>, %arg11: memref<8x2x128xf32, #tpu.memory_space<vmem>>) attributes {dimension_semantics = [#tpu.dimension_semantics<parallel>], iteration_bounds = array<i64: 1>, scalar_prefetch = 0 : i64, scratch_operands = 1 : i64, tpu.core_type = #tpu.core_type<tc>, window_params = [{transform_indices = @transform_0, window_bounds = array<i64: 8, 2, 16>}, {pipeline_mode = #tpu.pipeline_mode<synchronous>, transform_indices = @transform_1, window_bounds = array<i64: 16, 128>}, {pipeline_mode = #tpu.pipeline_mode<synchronous>, transform_indices = @transform_2, window_bounds = array<i64: 32, 128>}, {pipeline_mode = #tpu.pipeline_mode<synchronous>, transform_indices = @transform_3, window_bounds = array<i64: 1, 128>}, {pipeline_mode = #tpu.pipeline_mode<synchronous>, transform_indices = @transform_4, window_bounds = array<i64: 32, 128>}, {pipeline_mode = #tpu.pipeline_mode<synchronous>, transform_indices = @transform_5, window_bounds = array<i64: 32, 128>}, {pipeline_mode = #tpu.pipeline_mode<synchronous>, transform_indices = @transform_6, window_bounds = array<i64: 1, 128>}, {pipeline_mode = #tpu.pipeline_mode<synchronous>, transform_indices = @transform_7, window_bounds = array<i64: 32, 128>}, {pipeline_mode = #tpu.pipeline_mode<synchronous>, transform_indices = @transform_8, window_bounds = array<i64: 1, 128>}, {transform_indices = @transform_9, window_bounds = array<i64: 8, 2, 128>}]} {
    %c0 = arith.constant 0 : index
    %c0_0 = arith.constant 0 : index
    %0 = vector.load %arg8[%c0, %c0_0] : memref<32x128xf32, #tpu.memory_space<vmem>>, vector<32x128xf32>
    %c0_1 = arith.constant 0 : index
    %c0_2 = arith.constant 0 : index
    %1 = vector.load %arg9[%c0_1, %c0_2] : memref<1x128xf32, #tpu.memory_space<vmem>>, vector<1x128xf32>
    %c0_3 = arith.constant 0 : index
    %c0_4 = arith.constant 0 : index
    %2 = vector.load %arg3[%c0_3, %c0_4] : memref<32x128xf32, #tpu.memory_space<vmem>>, vector<32x128xf32>
    %c0_5 = arith.constant 0 : index
    %c0_6 = arith.constant 0 : index
    %3 = vector.load %arg2[%c0_5, %c0_6] : memref<16x128xf32, #tpu.memory_space<vmem>>, vector<16x128xf32>
    %c0_7 = arith.constant 0 : index
    %c0_8 = arith.constant 0 : index
    %4 = vector.load %arg4[%c0_7, %c0_8] : memref<1x128xf32, #tpu.memory_space<vmem>>, vector<1x128xf32>
    %c0_9 = arith.constant 0 : index
    %c0_10 = arith.constant 0 : index
    %5 = vector.load %arg5[%c0_9, %c0_10] : memref<32x128xf32, #tpu.memory_space<vmem>>, vector<32x128xf32>
    %c0_11 = arith.constant 0 : index
    %c0_12 = arith.constant 0 : index
    %6 = vector.load %arg7[%c0_11, %c0_12] : memref<1x128xf32, #tpu.memory_space<vmem>>, vector<1x128xf32>
    %cst = arith.constant 0.000000e+00 : f32
    %7 = vector.broadcast %cst : f32 to vector<2x32xf32>
    %cst_13 = arith.constant 0.000000e+00 : f32
    %8 = vector.broadcast %cst_13 : f32 to vector<2x32xf32>
    %c0_14 = arith.constant 0 : index
    %c0_15 = arith.constant 0 : index
    %c0_16 = arith.constant 0 : index
    %9 = vector.load %arg1[%c0_14, %c0_15, %c0_16] : memref<8x2x16xf32, #tpu.memory_space<vmem>>, vector<1x2x16xf32>
    %10 = vector.shape_cast %9 : vector<1x2x16xf32> to vector<2x16xf32>
    %cst_17 = arith.constant dense<0.000000e+00> : vector<2x128xf32>
    %11 = tpu.matmul %10, %3, %cst_17 {dimension_numbers = #tpu.dot_dimension_numbers<[1], [0], [0], [1], [0, 0, 1, 1], [], []>} : vector<2x16xf32>, vector<16x128xf32>, vector<2x128xf32> -> vector<2x128xf32>
    %12 = vector.broadcast %4 : vector<1x128xf32> to vector<2x128xf32>
    %13 = arith.addf %11, %12 : vector<2x128xf32>
    %cst_18 = arith.constant dense<0.000000e+00> : vector<2x128xf32>
    %14 = tpu.matmul %7, %2, %cst_18 {dimension_numbers = #tpu.dot_dimension_numbers<[1], [0], [0], [1], [0, 0, 1, 1], [], []>} : vector<2x32xf32>, vector<32x128xf32>, vector<2x128xf32> -> vector<2x128xf32>
    %15 = arith.addf %13, %14 : vector<2x128xf32>
    %16 = vector.extract_strided_slice %15 {offsets = [0, 0], sizes = [2, 96], strides = [1, 1]} : vector<2x128xf32> to vector<2x96xf32>
    %17 = arith.negf %16 : vector<2x96xf32>
    %18 = math.exp %17 : vector<2x96xf32>
    %cst_19 = arith.constant 1.000000e+00 : f32
    %19 = vector.broadcast %cst_19 : f32 to vector<2x96xf32>
    %20 = arith.addf %19, %18 : vector<2x96xf32>
    %21 = arith.divf %19, %20 : vector<2x96xf32>
    %22 = vector.extract_strided_slice %15 {offsets = [0, 96], sizes = [2, 32], strides = [1, 1]} : vector<2x128xf32> to vector<2x32xf32>
    %23 = math.tanh %22 : vector<2x32xf32>
    %24 = vector.extract_strided_slice %21 {offsets = [0, 32], sizes = [2, 32], strides = [1, 1]} : vector<2x96xf32> to vector<2x32xf32>
    %25 = arith.mulf %24, %8 : vector<2x32xf32>
    %26 = vector.extract_strided_slice %21 {offsets = [0, 0], sizes = [2, 32], strides = [1, 1]} : vector<2x96xf32> to vector<2x32xf32>
    %27 = arith.mulf %26, %23 : vector<2x32xf32>
    %28 = arith.addf %25, %27 : vector<2x32xf32>
    %29 = vector.extract_strided_slice %21 {offsets = [0, 64], sizes = [2, 32], strides = [1, 1]} : vector<2x96xf32> to vector<2x32xf32>
    %30 = math.tanh %28 : vector<2x32xf32>
    %31 = arith.mulf %29, %30 : vector<2x32xf32>
    %cst_20 = arith.constant dense<0.000000e+00> : vector<2x128xf32>
    %32 = tpu.matmul %31, %5, %cst_20 {dimension_numbers = #tpu.dot_dimension_numbers<[1], [0], [0], [1], [0, 0, 1, 1], [], []>} : vector<2x32xf32>, vector<32x128xf32>, vector<2x128xf32> -> vector<2x128xf32>
    %33 = vector.broadcast %6 : vector<1x128xf32> to vector<2x128xf32>
    %34 = arith.addf %32, %33 : vector<2x128xf32>
    %c0_21 = arith.constant 0 : index
    %c0_22 = arith.constant 0 : index
    %c0_23 = arith.constant 0 : index
    %35 = vector.load %arg11[%c0_21, %c0_22, %c0_23] : memref<8x2x128xf32, #tpu.memory_space<vmem>>, vector<1x2x128xf32>
    %36 = vector.shape_cast %35 : vector<1x2x128xf32> to vector<2x128xf32>
    %37 = vector.shape_cast %34 : vector<2x128xf32> to vector<1x2x128xf32>
    tpu.vector_store %arg11[%c0_21, %c0_22, %c0_23], %37 {strides = array<i32>} : memref<8x2x128xf32, #tpu.memory_space<vmem>>, vector<1x2x128xf32>,
    %c1 = arith.constant 1 : index
    %c0_24 = arith.constant 0 : index
    %c0_25 = arith.constant 0 : index
    %38 = vector.load %arg1[%c1, %c0_24, %c0_25] : memref<8x2x16xf32, #tpu.memory_space<vmem>>, vector<1x2x16xf32>
    %39 = vector.shape_cast %38 : vector<1x2x16xf32> to vector<2x16xf32>
    %cst_26 = arith.constant dense<0.000000e+00> : vector<2x128xf32>
    %40 = tpu.matmul %39, %3, %cst_26 {dimension_numbers = #tpu.dot_dimension_numbers<[1], [0], [0], [1], [0, 0, 1, 1], [], []>} : vector<2x16xf32>, vector<16x128xf32>, vector<2x128xf32> -> vector<2x128xf32>
    %41 = vector.broadcast %4 : vector<1x128xf32> to vector<2x128xf32>
    %42 = arith.addf %40, %41 : vector<2x128xf32>
    %cst_27 = arith.constant dense<0.000000e+00> : vector<2x128xf32>
    %43 = tpu.matmul %31, %2, %cst_27 {dimension_numbers = #tpu.dot_dimension_numbers<[1], [0], [0], [1], [0, 0, 1, 1], [], []>} : vector<2x32xf32>, vector<32x128xf32>, vector<2x128xf32> -> vector<2x128xf32>
    %44 = arith.addf %42, %43 : vector<2x128xf32>
    %45 = vector.extract_strided_slice %44 {offsets = [0, 0], sizes = [2, 96], strides = [1, 1]} : vector<2x128xf32> to vector<2x96xf32>
    %46 = arith.negf %45 : vector<2x96xf32>
    %47 = math.exp %46 : vector<2x96xf32>
    %cst_28 = arith.constant 1.000000e+00 : f32
    %48 = vector.broadcast %cst_28 : f32 to vector<2x96xf32>
    %49 = arith.addf %48, %47 : vector<2x96xf32>
    %50 = arith.divf %48, %49 : vector<2x96xf32>
    %51 = vector.extract_strided_slice %44 {offsets = [0, 96], sizes = [2, 32], strides = [1, 1]} : vector<2x128xf32> to vector<2x32xf32>
    %52 = math.tanh %51 : vector<2x32xf32>
    %53 = vector.extract_strided_slice %50 {offsets = [0, 32], sizes = [2, 32], strides = [1, 1]} : vector<2x96xf32> to vector<2x32xf32>
    %54 = arith.mulf %53, %28 : vector<2x32xf32>
    %55 = vector.extract_strided_slice %50 {offsets = [0, 0], sizes = [2, 32], strides = [1, 1]} : vector<2x96xf32> to vector<2x32xf32>
    %56 = arith.mulf %55, %52 : vector<2x32xf32>
    %57 = arith.addf %54, %56 : vector<2x32xf32>
    %58 = vector.extract_strided_slice %50 {offsets = [0, 64], sizes = [2, 32], strides = [1, 1]} : vector<2x96xf32> to vector<2x32xf32>
    %59 = math.tanh %57 : vector<2x32xf32>
    %60 = arith.mulf %58, %59 : vector<2x32xf32>
    %cst_29 = arith.constant dense<0.000000e+00> : vector<2x128xf32>
    %61 = tpu.matmul %60, %5, %cst_29 {dimension_numbers = #tpu.dot_dimension_numbers<[1], [0], [0], [1], [0, 0, 1, 1], [], []>} : vector<2x32xf32>, vector<32x128xf32>, vector<2x128xf32> -> vector<2x128xf32>
    %62 = vector.broadcast %6 : vector<1x128xf32> to vector<2x128xf32>
    %63 = arith.addf %61, %62 : vector<2x128xf32>
    %c1_30 = arith.constant 1 : index
    %c0_31 = arith.constant 0 : index
    %c0_32 = arith.constant 0 : index
    %64 = vector.load %arg11[%c1_30, %c0_31, %c0_32] : memref<8x2x128xf32, #tpu.memory_space<vmem>>, vector<1x2x128xf32>
    %65 = vector.shape_cast %64 : vector<1x2x128xf32> to vector<2x128xf32>
    %66 = vector.shape_cast %63 : vector<2x128xf32> to vector<1x2x128xf32>
    tpu.vector_store %arg11[%c1_30, %c0_31, %c0_32], %66 {strides = array<i32>} : memref<8x2x128xf32, #tpu.memory_space<vmem>>, vector<1x2x128xf32>,
    %c2 = arith.constant 2 : index
    %c0_33 = arith.constant 0 : index
    %c0_34 = arith.constant 0 : index
    %67 = vector.load %arg1[%c2, %c0_33, %c0_34] : memref<8x2x16xf32, #tpu.memory_space<vmem>>, vector<1x2x16xf32>
    %68 = vector.shape_cast %67 : vector<1x2x16xf32> to vector<2x16xf32>
    %cst_35 = arith.constant dense<0.000000e+00> : vector<2x128xf32>
    %69 = tpu.matmul %68, %3, %cst_35 {dimension_numbers = #tpu.dot_dimension_numbers<[1], [0], [0], [1], [0, 0, 1, 1], [], []>} : vector<2x16xf32>, vector<16x128xf32>, vector<2x128xf32> -> vector<2x128xf32>
    %70 = vector.broadcast %4 : vector<1x128xf32> to vector<2x128xf32>
    %71 = arith.addf %69, %70 : vector<2x128xf32>
    %cst_36 = arith.constant dense<0.000000e+00> : vector<2x128xf32>
    %72 = tpu.matmul %60, %2, %cst_36 {dimension_numbers = #tpu.dot_dimension_numbers<[1], [0], [0], [1], [0, 0, 1, 1], [], []>} : vector<2x32xf32>, vector<32x128xf32>, vector<2x128xf32> -> vector<2x128xf32>
    %73 = arith.addf %71, %72 : vector<2x128xf32>
    %74 = vector.extract_strided_slice %73 {offsets = [0, 0], sizes = [2, 96], strides = [1, 1]} : vector<2x128xf32> to vector<2x96xf32>
    %75 = arith.negf %74 : vector<2x96xf32>
    %76 = math.exp %75 : vector<2x96xf32>
    %cst_37 = arith.constant 1.000000e+00 : f32
    %77 = vector.broadcast %cst_37 : f32 to vector<2x96xf32>
    %78 = arith.addf %77, %76 : vector<2x96xf32>
    %79 = arith.divf %77, %78 : vector<2x96xf32>
    %80 = vector.extract_strided_slice %73 {offsets = [0, 96], sizes = [2, 32], strides = [1, 1]} : vector<2x128xf32> to vector<2x32xf32>
    %81 = math.tanh %80 : vector<2x32xf32>
    %82 = vector.extract_strided_slice %79 {offsets = [0, 32], sizes = [2, 32], strides = [1, 1]} : vector<2x96xf32> to vector<2x32xf32>
    %83 = arith.mulf %82, %57 : vector<2x32xf32>
    %84 = vector.extract_strided_slice %79 {offsets = [0, 0], sizes = [2, 32], strides = [1, 1]} : vector<2x96xf32> to vector<2x32xf32>
    %85 = arith.mulf %84, %81 : vector<2x32xf32>
    %86 = arith.addf %83, %85 : vector<2x32xf32>
    %87 = vector.extract_strided_slice %79 {offsets = [0, 64], sizes = [2, 32], strides = [1, 1]} : vector<2x96xf32> to vector<2x32xf32>
    %88 = math.tanh %86 : vector<2x32xf32>
    %89 = arith.mulf %87, %88 : vector<2x32xf32>
    %cst_38 = arith.constant dense<0.000000e+00> : vector<2x128xf32>
    %90 = tpu.matmul %89, %5, %cst_38 {dimension_numbers = #tpu.dot_dimension_numbers<[1], [0], [0], [1], [0, 0, 1, 1], [], []>} : vector<2x32xf32>, vector<32x128xf32>, vector<2x128xf32> -> vector<2x128xf32>
    %91 = vector.broadcast %6 : vector<1x128xf32> to vector<2x128xf32>
    %92 = arith.addf %90, %91 : vector<2x128xf32>
    %c2_39 = arith.constant 2 : index
    %c0_40 = arith.constant 0 : index
    %c0_41 = arith.constant 0 : index
    %93 = vector.load %arg11[%c2_39, %c0_40, %c0_41] : memref<8x2x128xf32, #tpu.memory_space<vmem>>, vector<1x2x128xf32>
    %94 = vector.shape_cast %93 : vector<1x2x128xf32> to vector<2x128xf32>
    %95 = vector.shape_cast %92 : vector<2x128xf32> to vector<1x2x128xf32>
    tpu.vector_store %arg11[%c2_39, %c0_40, %c0_41], %95 {strides = array<i32>} : memref<8x2x128xf32, #tpu.memory_space<vmem>>, vector<1x2x128xf32>,
    %c3 = arith.constant 3 : index
    %c0_42 = arith.constant 0 : index
    %c0_43 = arith.constant 0 : index
    %96 = vector.load %arg1[%c3, %c0_42, %c0_43] : memref<8x2x16xf32, #tpu.memory_space<vmem>>, vector<1x2x16xf32>
    %97 = vector.shape_cast %96 : vector<1x2x16xf32> to vector<2x16xf32>
    %cst_44 = arith.constant dense<0.000000e+00> : vector<2x128xf32>
    %98 = tpu.matmul %97, %3, %cst_44 {dimension_numbers = #tpu.dot_dimension_numbers<[1], [0], [0], [1], [0, 0, 1, 1], [], []>} : vector<2x16xf32>, vector<16x128xf32>, vector<2x128xf32> -> vector<2x128xf32>
    %99 = vector.broadcast %4 : vector<1x128xf32> to vector<2x128xf32>
    %100 = arith.addf %98, %99 : vector<2x128xf32>
    %cst_45 = arith.constant dense<0.000000e+00> : vector<2x128xf32>
    %101 = tpu.matmul %89, %2, %cst_45 {dimension_numbers = #tpu.dot_dimension_numbers<[1], [0], [0], [1], [0, 0, 1, 1], [], []>} : vector<2x32xf32>, vector<32x128xf32>, vector<2x128xf32> -> vector<2x128xf32>
    %102 = arith.addf %100, %101 : vector<2x128xf32>
    %103 = vector.extract_strided_slice %102 {offsets = [0, 0], sizes = [2, 96], strides = [1, 1]} : vector<2x128xf32> to vector<2x96xf32>
    %104 = arith.negf %103 : vector<2x96xf32>
    %105 = math.exp %104 : vector<2x96xf32>
    %cst_46 = arith.constant 1.000000e+00 : f32
    %106 = vector.broadcast %cst_46 : f32 to vector<2x96xf32>
    %107 = arith.addf %106, %105 : vector<2x96xf32>
    %108 = arith.divf %106, %107 : vector<2x96xf32>
    %109 = vector.extract_strided_slice %102 {offsets = [0, 96], sizes = [2, 32], strides = [1, 1]} : vector<2x128xf32> to vector<2x32xf32>
    %110 = math.tanh %109 : vector<2x32xf32>
    %111 = vector.extract_strided_slice %108 {offsets = [0, 32], sizes = [2, 32], strides = [1, 1]} : vector<2x96xf32> to vector<2x32xf32>
    %112 = arith.mulf %111, %86 : vector<2x32xf32>
    %113 = vector.extract_strided_slice %108 {offsets = [0, 0], sizes = [2, 32], strides = [1, 1]} : vector<2x96xf32> to vector<2x32xf32>
    %114 = arith.mulf %113, %110 : vector<2x32xf32>
    %115 = arith.addf %112, %114 : vector<2x32xf32>
    %116 = vector.extract_strided_slice %108 {offsets = [0, 64], sizes = [2, 32], strides = [1, 1]} : vector<2x96xf32> to vector<2x32xf32>
    %117 = math.tanh %115 : vector<2x32xf32>
    %118 = arith.mulf %116, %117 : vector<2x32xf32>
    %cst_47 = arith.constant dense<0.000000e+00> : vector<2x128xf32>
    %119 = tpu.matmul %118, %5, %cst_47 {dimension_numbers = #tpu.dot_dimension_numbers<[1], [0], [0], [1], [0, 0, 1, 1], [], []>} : vector<2x32xf32>, vector<32x128xf32>, vector<2x128xf32> -> vector<2x128xf32>
    %120 = vector.broadcast %6 : vector<1x128xf32> to vector<2x128xf32>
    %121 = arith.addf %119, %120 : vector<2x128xf32>
    %c3_48 = arith.constant 3 : index
    %c0_49 = arith.constant 0 : index
    %c0_50 = arith.constant 0 : index
    %122 = vector.load %arg11[%c3_48, %c0_49, %c0_50] : memref<8x2x128xf32, #tpu.memory_space<vmem>>, vector<1x2x128xf32>
    %123 = vector.shape_cast %122 : vector<1x2x128xf32> to vector<2x128xf32>
    %124 = vector.shape_cast %121 : vector<2x128xf32> to vector<1x2x128xf32>
    tpu.vector_store %arg11[%c3_48, %c0_49, %c0_50], %124 {strides = array<i32>} : memref<8x2x128xf32, #tpu.memory_space<vmem>>, vector<1x2x128xf32>,
    %c4 = arith.constant 4 : index
    %c0_51 = arith.constant 0 : index
    %c0_52 = arith.constant 0 : index
    %125 = vector.load %arg1[%c4, %c0_51, %c0_52] : memref<8x2x16xf32, #tpu.memory_space<vmem>>, vector<1x2x16xf32>
    %126 = vector.shape_cast %125 : vector<1x2x16xf32> to vector<2x16xf32>
    %cst_53 = arith.constant dense<0.000000e+00> : vector<2x128xf32>
    %127 = tpu.matmul %126, %3, %cst_53 {dimension_numbers = #tpu.dot_dimension_numbers<[1], [0], [0], [1], [0, 0, 1, 1], [], []>} : vector<2x16xf32>, vector<16x128xf32>, vector<2x128xf32> -> vector<2x128xf32>
    %128 = vector.broadcast %4 : vector<1x128xf32> to vector<2x128xf32>
    %129 = arith.addf %127, %128 : vector<2x128xf32>
    %cst_54 = arith.constant dense<0.000000e+00> : vector<2x128xf32>
    %130 = tpu.matmul %118, %2, %cst_54 {dimension_numbers = #tpu.dot_dimension_numbers<[1], [0], [0], [1], [0, 0, 1, 1], [], []>} : vector<2x32xf32>, vector<32x128xf32>, vector<2x128xf32> -> vector<2x128xf32>
    %131 = arith.addf %129, %130 : vector<2x128xf32>
    %132 = vector.extract_strided_slice %131 {offsets = [0, 0], sizes = [2, 96], strides = [1, 1]} : vector<2x128xf32> to vector<2x96xf32>
    %133 = arith.negf %132 : vector<2x96xf32>
    %134 = math.exp %133 : vector<2x96xf32>
    %cst_55 = arith.constant 1.000000e+00 : f32
    %135 = vector.broadcast %cst_55 : f32 to vector<2x96xf32>
    %136 = arith.addf %135, %134 : vector<2x96xf32>
    %137 = arith.divf %135, %136 : vector<2x96xf32>
    %138 = vector.extract_strided_slice %131 {offsets = [0, 96], sizes = [2, 32], strides = [1, 1]} : vector<2x128xf32> to vector<2x32xf32>
    %139 = math.tanh %138 : vector<2x32xf32>
    %140 = vector.extract_strided_slice %137 {offsets = [0, 32], sizes = [2, 32], strides = [1, 1]} : vector<2x96xf32> to vector<2x32xf32>
    %141 = arith.mulf %140, %115 : vector<2x32xf32>
    %142 = vector.extract_strided_slice %137 {offsets = [0, 0], sizes = [2, 32], strides = [1, 1]} : vector<2x96xf32> to vector<2x32xf32>
    %143 = arith.mulf %142, %139 : vector<2x32xf32>
    %144 = arith.addf %141, %143 : vector<2x32xf32>
    %145 = vector.extract_strided_slice %137 {offsets = [0, 64], sizes = [2, 32], strides = [1, 1]} : vector<2x96xf32> to vector<2x32xf32>
    %146 = math.tanh %144 : vector<2x32xf32>
    %147 = arith.mulf %145, %146 : vector<2x32xf32>
    %cst_56 = arith.constant dense<0.000000e+00> : vector<2x128xf32>
    %148 = tpu.matmul %147, %5, %cst_56 {dimension_numbers = #tpu.dot_dimension_numbers<[1], [0], [0], [1], [0, 0, 1, 1], [], []>} : vector<2x32xf32>, vector<32x128xf32>, vector<2x128xf32> -> vector<2x128xf32>
    %149 = vector.broadcast %6 : vector<1x128xf32> to vector<2x128xf32>
    %150 = arith.addf %148, %149 : vector<2x128xf32>
    %c4_57 = arith.constant 4 : index
    %c0_58 = arith.constant 0 : index
    %c0_59 = arith.constant 0 : index
    %151 = vector.load %arg11[%c4_57, %c0_58, %c0_59] : memref<8x2x128xf32, #tpu.memory_space<vmem>>, vector<1x2x128xf32>
    %152 = vector.shape_cast %151 : vector<1x2x128xf32> to vector<2x128xf32>
    %153 = vector.shape_cast %150 : vector<2x128xf32> to vector<1x2x128xf32>
    tpu.vector_store %arg11[%c4_57, %c0_58, %c0_59], %153 {strides = array<i32>} : memref<8x2x128xf32, #tpu.memory_space<vmem>>, vector<1x2x128xf32>,
    %c5 = arith.constant 5 : index
    %c0_60 = arith.constant 0 : index
    %c0_61 = arith.constant 0 : index
    %154 = vector.load %arg1[%c5, %c0_60, %c0_61] : memref<8x2x16xf32, #tpu.memory_space<vmem>>, vector<1x2x16xf32>
    %155 = vector.shape_cast %154 : vector<1x2x16xf32> to vector<2x16xf32>
    %cst_62 = arith.constant dense<0.000000e+00> : vector<2x128xf32>
    %156 = tpu.matmul %155, %3, %cst_62 {dimension_numbers = #tpu.dot_dimension_numbers<[1], [0], [0], [1], [0, 0, 1, 1], [], []>} : vector<2x16xf32>, vector<16x128xf32>, vector<2x128xf32> -> vector<2x128xf32>
    %157 = vector.broadcast %4 : vector<1x128xf32> to vector<2x128xf32>
    %158 = arith.addf %156, %157 : vector<2x128xf32>
    %cst_63 = arith.constant dense<0.000000e+00> : vector<2x128xf32>
    %159 = tpu.matmul %147, %2, %cst_63 {dimension_numbers = #tpu.dot_dimension_numbers<[1], [0], [0], [1], [0, 0, 1, 1], [], []>} : vector<2x32xf32>, vector<32x128xf32>, vector<2x128xf32> -> vector<2x128xf32>
    %160 = arith.addf %158, %159 : vector<2x128xf32>
    %161 = vector.extract_strided_slice %160 {offsets = [0, 0], sizes = [2, 96], strides = [1, 1]} : vector<2x128xf32> to vector<2x96xf32>
    %162 = arith.negf %161 : vector<2x96xf32>
    %163 = math.exp %162 : vector<2x96xf32>
    %cst_64 = arith.constant 1.000000e+00 : f32
    %164 = vector.broadcast %cst_64 : f32 to vector<2x96xf32>
    %165 = arith.addf %164, %163 : vector<2x96xf32>
    %166 = arith.divf %164, %165 : vector<2x96xf32>
    %167 = vector.extract_strided_slice %160 {offsets = [0, 96], sizes = [2, 32], strides = [1, 1]} : vector<2x128xf32> to vector<2x32xf32>
    %168 = math.tanh %167 : vector<2x32xf32>
    %169 = vector.extract_strided_slice %166 {offsets = [0, 32], sizes = [2, 32], strides = [1, 1]} : vector<2x96xf32> to vector<2x32xf32>
    %170 = arith.mulf %169, %144 : vector<2x32xf32>
    %171 = vector.extract_strided_slice %166 {offsets = [0, 0], sizes = [2, 32], strides = [1, 1]} : vector<2x96xf32> to vector<2x32xf32>
    %172 = arith.mulf %171, %168 : vector<2x32xf32>
    %173 = arith.addf %170, %172 : vector<2x32xf32>
    %174 = vector.extract_strided_slice %166 {offsets = [0, 64], sizes = [2, 32], strides = [1, 1]} : vector<2x96xf32> to vector<2x32xf32>
    %175 = math.tanh %173 : vector<2x32xf32>
    %176 = arith.mulf %174, %175 : vector<2x32xf32>
    %cst_65 = arith.constant dense<0.000000e+00> : vector<2x128xf32>
    %177 = tpu.matmul %176, %5, %cst_65 {dimension_numbers = #tpu.dot_dimension_numbers<[1], [0], [0], [1], [0, 0, 1, 1], [], []>} : vector<2x32xf32>, vector<32x128xf32>, vector<2x128xf32> -> vector<2x128xf32>
    %178 = vector.broadcast %6 : vector<1x128xf32> to vector<2x128xf32>
    %179 = arith.addf %177, %178 : vector<2x128xf32>
    %c5_66 = arith.constant 5 : index
    %c0_67 = arith.constant 0 : index
    %c0_68 = arith.constant 0 : index
    %180 = vector.load %arg11[%c5_66, %c0_67, %c0_68] : memref<8x2x128xf32, #tpu.memory_space<vmem>>, vector<1x2x128xf32>
    %181 = vector.shape_cast %180 : vector<1x2x128xf32> to vector<2x128xf32>
    %182 = vector.shape_cast %179 : vector<2x128xf32> to vector<1x2x128xf32>
    tpu.vector_store %arg11[%c5_66, %c0_67, %c0_68], %182 {strides = array<i32>} : memref<8x2x128xf32, #tpu.memory_space<vmem>>, vector<1x2x128xf32>,
    %c6 = arith.constant 6 : index
    %c0_69 = arith.constant 0 : index
    %c0_70 = arith.constant 0 : index
    %183 = vector.load %arg1[%c6, %c0_69, %c0_70] : memref<8x2x16xf32, #tpu.memory_space<vmem>>, vector<1x2x16xf32>
    %184 = vector.shape_cast %183 : vector<1x2x16xf32> to vector<2x16xf32>
    %cst_71 = arith.constant dense<0.000000e+00> : vector<2x128xf32>
    %185 = tpu.matmul %184, %3, %cst_71 {dimension_numbers = #tpu.dot_dimension_numbers<[1], [0], [0], [1], [0, 0, 1, 1], [], []>} : vector<2x16xf32>, vector<16x128xf32>, vector<2x128xf32> -> vector<2x128xf32>
    %186 = vector.broadcast %4 : vector<1x128xf32> to vector<2x128xf32>
    %187 = arith.addf %185, %186 : vector<2x128xf32>
    %cst_72 = arith.constant dense<0.000000e+00> : vector<2x128xf32>
    %188 = tpu.matmul %176, %2, %cst_72 {dimension_numbers = #tpu.dot_dimension_numbers<[1], [0], [0], [1], [0, 0, 1, 1], [], []>} : vector<2x32xf32>, vector<32x128xf32>, vector<2x128xf32> -> vector<2x128xf32>
    %189 = arith.addf %187, %188 : vector<2x128xf32>
    %190 = vector.extract_strided_slice %189 {offsets = [0, 0], sizes = [2, 96], strides = [1, 1]} : vector<2x128xf32> to vector<2x96xf32>
    %191 = arith.negf %190 : vector<2x96xf32>
    %192 = math.exp %191 : vector<2x96xf32>
    %cst_73 = arith.constant 1.000000e+00 : f32
    %193 = vector.broadcast %cst_73 : f32 to vector<2x96xf32>
    %194 = arith.addf %193, %192 : vector<2x96xf32>
    %195 = arith.divf %193, %194 : vector<2x96xf32>
    %196 = vector.extract_strided_slice %189 {offsets = [0, 96], sizes = [2, 32], strides = [1, 1]} : vector<2x128xf32> to vector<2x32xf32>
    %197 = math.tanh %196 : vector<2x32xf32>
    %198 = vector.extract_strided_slice %195 {offsets = [0, 32], sizes = [2, 32], strides = [1, 1]} : vector<2x96xf32> to vector<2x32xf32>
    %199 = arith.mulf %198, %173 : vector<2x32xf32>
    %200 = vector.extract_strided_slice %195 {offsets = [0, 0], sizes = [2, 32], strides = [1, 1]} : vector<2x96xf32> to vector<2x32xf32>
    %201 = arith.mulf %200, %197 : vector<2x32xf32>
    %202 = arith.addf %199, %201 : vector<2x32xf32>
    %203 = vector.extract_strided_slice %195 {offsets = [0, 64], sizes = [2, 32], strides = [1, 1]} : vector<2x96xf32> to vector<2x32xf32>
    %204 = math.tanh %202 : vector<2x32xf32>
    %205 = arith.mulf %203, %204 : vector<2x32xf32>
    %cst_74 = arith.constant dense<0.000000e+00> : vector<2x128xf32>
    %206 = tpu.matmul %205, %5, %cst_74 {dimension_numbers = #tpu.dot_dimension_numbers<[1], [0], [0], [1], [0, 0, 1, 1], [], []>} : vector<2x32xf32>, vector<32x128xf32>, vector<2x128xf32> -> vector<2x128xf32>
    %207 = vector.broadcast %6 : vector<1x128xf32> to vector<2x128xf32>
    %208 = arith.addf %206, %207 : vector<2x128xf32>
    %c6_75 = arith.constant 6 : index
    %c0_76 = arith.constant 0 : index
    %c0_77 = arith.constant 0 : index
    %209 = vector.load %arg11[%c6_75, %c0_76, %c0_77] : memref<8x2x128xf32, #tpu.memory_space<vmem>>, vector<1x2x128xf32>
    %210 = vector.shape_cast %209 : vector<1x2x128xf32> to vector<2x128xf32>
    %211 = vector.shape_cast %208 : vector<2x128xf32> to vector<1x2x128xf32>
    tpu.vector_store %arg11[%c6_75, %c0_76, %c0_77], %211 {strides = array<i32>} : memref<8x2x128xf32, #tpu.memory_space<vmem>>, vector<1x2x128xf32>,
    %c7 = arith.constant 7 : index
    %c0_78 = arith.constant 0 : index
    %c0_79 = arith.constant 0 : index
    %212 = vector.load %arg1[%c7, %c0_78, %c0_79] : memref<8x2x16xf32, #tpu.memory_space<vmem>>, vector<1x2x16xf32>
    %213 = vector.shape_cast %212 : vector<1x2x16xf32> to vector<2x16xf32>
    %cst_80 = arith.constant dense<0.000000e+00> : vector<2x128xf32>
    %214 = tpu.matmul %213, %3, %cst_80 {dimension_numbers = #tpu.dot_dimension_numbers<[1], [0], [0], [1], [0, 0, 1, 1], [], []>} : vector<2x16xf32>, vector<16x128xf32>, vector<2x128xf32> -> vector<2x128xf32>
    %215 = vector.broadcast %4 : vector<1x128xf32> to vector<2x128xf32>
    %216 = arith.addf %214, %215 : vector<2x128xf32>
    %cst_81 = arith.constant dense<0.000000e+00> : vector<2x128xf32>
    %217 = tpu.matmul %205, %2, %cst_81 {dimension_numbers = #tpu.dot_dimension_numbers<[1], [0], [0], [1], [0, 0, 1, 1], [], []>} : vector<2x32xf32>, vector<32x128xf32>, vector<2x128xf32> -> vector<2x128xf32>
    %218 = arith.addf %216, %217 : vector<2x128xf32>
    %219 = vector.extract_strided_slice %218 {offsets = [0, 0], sizes = [2, 96], strides = [1, 1]} : vector<2x128xf32> to vector<2x96xf32>
    %220 = arith.negf %219 : vector<2x96xf32>
    %221 = math.exp %220 : vector<2x96xf32>
    %cst_82 = arith.constant 1.000000e+00 : f32
    %222 = vector.broadcast %cst_82 : f32 to vector<2x96xf32>
    %223 = arith.addf %222, %221 : vector<2x96xf32>
    %224 = arith.divf %222, %223 : vector<2x96xf32>
    %225 = vector.extract_strided_slice %218 {offsets = [0, 96], sizes = [2, 32], strides = [1, 1]} : vector<2x128xf32> to vector<2x32xf32>
    %226 = math.tanh %225 : vector<2x32xf32>
    %227 = vector.extract_strided_slice %224 {offsets = [0, 32], sizes = [2, 32], strides = [1, 1]} : vector<2x96xf32> to vector<2x32xf32>
    %228 = arith.mulf %227, %202 : vector<2x32xf32>
    %229 = vector.extract_strided_slice %224 {offsets = [0, 0], sizes = [2, 32], strides = [1, 1]} : vector<2x96xf32> to vector<2x32xf32>
    %230 = arith.mulf %229, %226 : vector<2x32xf32>
    %231 = arith.addf %228, %230 : vector<2x32xf32>
    %232 = vector.extract_strided_slice %224 {offsets = [0, 64], sizes = [2, 32], strides = [1, 1]} : vector<2x96xf32> to vector<2x32xf32>
    %233 = math.tanh %231 : vector<2x32xf32>
    %234 = arith.mulf %232, %233 : vector<2x32xf32>
    %cst_83 = arith.constant dense<0.000000e+00> : vector<2x128xf32>
    %235 = tpu.matmul %234, %5, %cst_83 {dimension_numbers = #tpu.dot_dimension_numbers<[1], [0], [0], [1], [0, 0, 1, 1], [], []>} : vector<2x32xf32>, vector<32x128xf32>, vector<2x128xf32> -> vector<2x128xf32>
    %236 = vector.broadcast %6 : vector<1x128xf32> to vector<2x128xf32>
    %237 = arith.addf %235, %236 : vector<2x128xf32>
    %c7_84 = arith.constant 7 : index
    %c0_85 = arith.constant 0 : index
    %c0_86 = arith.constant 0 : index
    %238 = vector.load %arg11[%c7_84, %c0_85, %c0_86] : memref<8x2x128xf32, #tpu.memory_space<vmem>>, vector<1x2x128xf32>
    %239 = vector.shape_cast %238 : vector<1x2x128xf32> to vector<2x128xf32>
    %240 = vector.shape_cast %237 : vector<2x128xf32> to vector<1x2x128xf32>
    tpu.vector_store %arg11[%c7_84, %c0_85, %c0_86], %240 {strides = array<i32>} : memref<8x2x128xf32, #tpu.memory_space<vmem>>, vector<1x2x128xf32>,
    %c0_87 = arith.constant 0 : index
    %c0_88 = arith.constant 0 : index
    %241 = vector.load %arg6[%c0_87, %c0_88] : memref<32x128xf32, #tpu.memory_space<vmem>>, vector<32x128xf32>
    %cst_89 = arith.constant 0.000000e+00 : f32
    %242 = vector.broadcast %cst_89 : f32 to vector<2x32xf32>
    %cst_90 = arith.constant 0.000000e+00 : f32
    %243 = vector.broadcast %cst_90 : f32 to vector<2x32xf32>
    %c0_91 = arith.constant 0 : index
    %c0_92 = arith.constant 0 : index
    %c0_93 = arith.constant 0 : index
    %244 = vector.load %arg11[%c0_91, %c0_92, %c0_93] : memref<8x2x128xf32, #tpu.memory_space<vmem>>, vector<1x2x128xf32>
    %245 = vector.shape_cast %244 : vector<1x2x128xf32> to vector<2x128xf32>
    %cst_94 = arith.constant dense<0.000000e+00> : vector<2x128xf32>
    %246 = tpu.matmul %242, %241, %cst_94 {dimension_numbers = #tpu.dot_dimension_numbers<[1], [0], [0], [1], [0, 0, 1, 1], [], []>} : vector<2x32xf32>, vector<32x128xf32>, vector<2x128xf32> -> vector<2x128xf32>
    %247 = arith.addf %245, %246 : vector<2x128xf32>
    %248 = vector.extract_strided_slice %247 {offsets = [0, 0], sizes = [2, 96], strides = [1, 1]} : vector<2x128xf32> to vector<2x96xf32>
    %249 = arith.negf %248 : vector<2x96xf32>
    %250 = math.exp %249 : vector<2x96xf32>
    %cst_95 = arith.constant 1.000000e+00 : f32
    %251 = vector.broadcast %cst_95 : f32 to vector<2x96xf32>
    %252 = arith.addf %251, %250 : vector<2x96xf32>
    %253 = arith.divf %251, %252 : vector<2x96xf32>
    %254 = vector.extract_strided_slice %247 {offsets = [0, 96], sizes = [2, 32], strides = [1, 1]} : vector<2x128xf32> to vector<2x32xf32>
    %255 = math.tanh %254 : vector<2x32xf32>
    %256 = vector.extract_strided_slice %253 {offsets = [0, 32], sizes = [2, 32], strides = [1, 1]} : vector<2x96xf32> to vector<2x32xf32>
    %257 = arith.mulf %256, %243 : vector<2x32xf32>
    %258 = vector.extract_strided_slice %253 {offsets = [0, 0], sizes = [2, 32], strides = [1, 1]} : vector<2x96xf32> to vector<2x32xf32>
    %259 = arith.mulf %258, %255 : vector<2x32xf32>
    %260 = arith.addf %257, %259 : vector<2x32xf32>
    %261 = vector.extract_strided_slice %253 {offsets = [0, 64], sizes = [2, 32], strides = [1, 1]} : vector<2x96xf32> to vector<2x32xf32>
    %262 = math.tanh %260 : vector<2x32xf32>
    %263 = arith.mulf %261, %262 : vector<2x32xf32>
    %cst_96 = arith.constant dense<0.000000e+00> : vector<2x128xf32>
    %264 = tpu.matmul %263, %0, %cst_96 {dimension_numbers = #tpu.dot_dimension_numbers<[1], [0], [0], [1], [0, 0, 1, 1], [], []>} : vector<2x32xf32>, vector<32x128xf32>, vector<2x128xf32> -> vector<2x128xf32>
    %265 = vector.broadcast %1 : vector<1x128xf32> to vector<2x128xf32>
    %266 = arith.addf %264, %265 : vector<2x128xf32>
    %c0_97 = arith.constant 0 : index
    %c0_98 = arith.constant 0 : index
    %c0_99 = arith.constant 0 : index
    %267 = vector.load %arg10[%c0_97, %c0_98, %c0_99] : memref<8x2x128xf32, #tpu.memory_space<vmem>>, vector<1x2x128xf32>
    %268 = vector.shape_cast %267 : vector<1x2x128xf32> to vector<2x128xf32>
    %269 = vector.shape_cast %266 : vector<2x128xf32> to vector<1x2x128xf32>
    tpu.vector_store %arg10[%c0_97, %c0_98, %c0_99], %269 {strides = array<i32>} : memref<8x2x128xf32, #tpu.memory_space<vmem>>, vector<1x2x128xf32>,
    %c1_100 = arith.constant 1 : index
    %c0_101 = arith.constant 0 : index
    %c0_102 = arith.constant 0 : index
    %270 = vector.load %arg11[%c1_100, %c0_101, %c0_102] : memref<8x2x128xf32, #tpu.memory_space<vmem>>, vector<1x2x128xf32>
    %271 = vector.shape_cast %270 : vector<1x2x128xf32> to vector<2x128xf32>
    %cst_103 = arith.constant dense<0.000000e+00> : vector<2x128xf32>
    %272 = tpu.matmul %263, %241, %cst_103 {dimension_numbers = #tpu.dot_dimension_numbers<[1], [0], [0], [1], [0, 0, 1, 1], [], []>} : vector<2x32xf32>, vector<32x128xf32>, vector<2x128xf32> -> vector<2x128xf32>
    %273 = arith.addf %271, %272 : vector<2x128xf32>
    %274 = vector.extract_strided_slice %273 {offsets = [0, 0], sizes = [2, 96], strides = [1, 1]} : vector<2x128xf32> to vector<2x96xf32>
    %275 = arith.negf %274 : vector<2x96xf32>
    %276 = math.exp %275 : vector<2x96xf32>
    %cst_104 = arith.constant 1.000000e+00 : f32
    %277 = vector.broadcast %cst_104 : f32 to vector<2x96xf32>
    %278 = arith.addf %277, %276 : vector<2x96xf32>
    %279 = arith.divf %277, %278 : vector<2x96xf32>
    %280 = vector.extract_strided_slice %273 {offsets = [0, 96], sizes = [2, 32], strides = [1, 1]} : vector<2x128xf32> to vector<2x32xf32>
    %281 = math.tanh %280 : vector<2x32xf32>
    %282 = vector.extract_strided_slice %279 {offsets = [0, 32], sizes = [2, 32], strides = [1, 1]} : vector<2x96xf32> to vector<2x32xf32>
    %283 = arith.mulf %282, %260 : vector<2x32xf32>
    %284 = vector.extract_strided_slice %279 {offsets = [0, 0], sizes = [2, 32], strides = [1, 1]} : vector<2x96xf32> to vector<2x32xf32>
    %285 = arith.mulf %284, %281 : vector<2x32xf32>
    %286 = arith.addf %283, %285 : vector<2x32xf32>
    %287 = vector.extract_strided_slice %279 {offsets = [0, 64], sizes = [2, 32], strides = [1, 1]} : vector<2x96xf32> to vector<2x32xf32>
    %288 = math.tanh %286 : vector<2x32xf32>
    %289 = arith.mulf %287, %288 : vector<2x32xf32>
    %cst_105 = arith.constant dense<0.000000e+00> : vector<2x128xf32>
    %290 = tpu.matmul %289, %0, %cst_105 {dimension_numbers = #tpu.dot_dimension_numbers<[1], [0], [0], [1], [0, 0, 1, 1], [], []>} : vector<2x32xf32>, vector<32x128xf32>, vector<2x128xf32> -> vector<2x128xf32>
    %291 = vector.broadcast %1 : vector<1x128xf32> to vector<2x128xf32>
    %292 = arith.addf %290, %291 : vector<2x128xf32>
    %c1_106 = arith.constant 1 : index
    %c0_107 = arith.constant 0 : index
    %c0_108 = arith.constant 0 : index
    %293 = vector.load %arg10[%c1_106, %c0_107, %c0_108] : memref<8x2x128xf32, #tpu.memory_space<vmem>>, vector<1x2x128xf32>
    %294 = vector.shape_cast %293 : vector<1x2x128xf32> to vector<2x128xf32>
    %295 = vector.shape_cast %292 : vector<2x128xf32> to vector<1x2x128xf32>
    tpu.vector_store %arg10[%c1_106, %c0_107, %c0_108], %295 {strides = array<i32>} : memref<8x2x128xf32, #tpu.memory_space<vmem>>, vector<1x2x128xf32>,
    %c2_109 = arith.constant 2 : index
    %c0_110 = arith.constant 0 : index
    %c0_111 = arith.constant 0 : index
    %296 = vector.load %arg11[%c2_109, %c0_110, %c0_111] : memref<8x2x128xf32, #tpu.memory_space<vmem>>, vector<1x2x128xf32>
    %297 = vector.shape_cast %296 : vector<1x2x128xf32> to vector<2x128xf32>
    %cst_112 = arith.constant dense<0.000000e+00> : vector<2x128xf32>
    %298 = tpu.matmul %289, %241, %cst_112 {dimension_numbers = #tpu.dot_dimension_numbers<[1], [0], [0], [1], [0, 0, 1, 1], [], []>} : vector<2x32xf32>, vector<32x128xf32>, vector<2x128xf32> -> vector<2x128xf32>
    %299 = arith.addf %297, %298 : vector<2x128xf32>
    %300 = vector.extract_strided_slice %299 {offsets = [0, 0], sizes = [2, 96], strides = [1, 1]} : vector<2x128xf32> to vector<2x96xf32>
    %301 = arith.negf %300 : vector<2x96xf32>
    %302 = math.exp %301 : vector<2x96xf32>
    %cst_113 = arith.constant 1.000000e+00 : f32
    %303 = vector.broadcast %cst_113 : f32 to vector<2x96xf32>
    %304 = arith.addf %303, %302 : vector<2x96xf32>
    %305 = arith.divf %303, %304 : vector<2x96xf32>
    %306 = vector.extract_strided_slice %299 {offsets = [0, 96], sizes = [2, 32], strides = [1, 1]} : vector<2x128xf32> to vector<2x32xf32>
    %307 = math.tanh %306 : vector<2x32xf32>
    %308 = vector.extract_strided_slice %305 {offsets = [0, 32], sizes = [2, 32], strides = [1, 1]} : vector<2x96xf32> to vector<2x32xf32>
    %309 = arith.mulf %308, %286 : vector<2x32xf32>
    %310 = vector.extract_strided_slice %305 {offsets = [0, 0], sizes = [2, 32], strides = [1, 1]} : vector<2x96xf32> to vector<2x32xf32>
    %311 = arith.mulf %310, %307 : vector<2x32xf32>
    %312 = arith.addf %309, %311 : vector<2x32xf32>
    %313 = vector.extract_strided_slice %305 {offsets = [0, 64], sizes = [2, 32], strides = [1, 1]} : vector<2x96xf32> to vector<2x32xf32>
    %314 = math.tanh %312 : vector<2x32xf32>
    %315 = arith.mulf %313, %314 : vector<2x32xf32>
    %cst_114 = arith.constant dense<0.000000e+00> : vector<2x128xf32>
    %316 = tpu.matmul %315, %0, %cst_114 {dimension_numbers = #tpu.dot_dimension_numbers<[1], [0], [0], [1], [0, 0, 1, 1], [], []>} : vector<2x32xf32>, vector<32x128xf32>, vector<2x128xf32> -> vector<2x128xf32>
    %317 = vector.broadcast %1 : vector<1x128xf32> to vector<2x128xf32>
    %318 = arith.addf %316, %317 : vector<2x128xf32>
    %c2_115 = arith.constant 2 : index
    %c0_116 = arith.constant 0 : index
    %c0_117 = arith.constant 0 : index
    %319 = vector.load %arg10[%c2_115, %c0_116, %c0_117] : memref<8x2x128xf32, #tpu.memory_space<vmem>>, vector<1x2x128xf32>
    %320 = vector.shape_cast %319 : vector<1x2x128xf32> to vector<2x128xf32>
    %321 = vector.shape_cast %318 : vector<2x128xf32> to vector<1x2x128xf32>
    tpu.vector_store %arg10[%c2_115, %c0_116, %c0_117], %321 {strides = array<i32>} : memref<8x2x128xf32, #tpu.memory_space<vmem>>, vector<1x2x128xf32>,
    %c3_118 = arith.constant 3 : index
    %c0_119 = arith.constant 0 : index
    %c0_120 = arith.constant 0 : index
    %322 = vector.load %arg11[%c3_118, %c0_119, %c0_120] : memref<8x2x128xf32, #tpu.memory_space<vmem>>, vector<1x2x128xf32>
    %323 = vector.shape_cast %322 : vector<1x2x128xf32> to vector<2x128xf32>
    %cst_121 = arith.constant dense<0.000000e+00> : vector<2x128xf32>
    %324 = tpu.matmul %315, %241, %cst_121 {dimension_numbers = #tpu.dot_dimension_numbers<[1], [0], [0], [1], [0, 0, 1, 1], [], []>} : vector<2x32xf32>, vector<32x128xf32>, vector<2x128xf32> -> vector<2x128xf32>
    %325 = arith.addf %323, %324 : vector<2x128xf32>
    %326 = vector.extract_strided_slice %325 {offsets = [0, 0], sizes = [2, 96], strides = [1, 1]} : vector<2x128xf32> to vector<2x96xf32>
    %327 = arith.negf %326 : vector<2x96xf32>
    %328 = math.exp %327 : vector<2x96xf32>
    %cst_122 = arith.constant 1.000000e+00 : f32
    %329 = vector.broadcast %cst_122 : f32 to vector<2x96xf32>
    %330 = arith.addf %329, %328 : vector<2x96xf32>
    %331 = arith.divf %329, %330 : vector<2x96xf32>
    %332 = vector.extract_strided_slice %325 {offsets = [0, 96], sizes = [2, 32], strides = [1, 1]} : vector<2x128xf32> to vector<2x32xf32>
    %333 = math.tanh %332 : vector<2x32xf32>
    %334 = vector.extract_strided_slice %331 {offsets = [0, 32], sizes = [2, 32], strides = [1, 1]} : vector<2x96xf32> to vector<2x32xf32>
    %335 = arith.mulf %334, %312 : vector<2x32xf32>
    %336 = vector.extract_strided_slice %331 {offsets = [0, 0], sizes = [2, 32], strides = [1, 1]} : vector<2x96xf32> to vector<2x32xf32>
    %337 = arith.mulf %336, %333 : vector<2x32xf32>
    %338 = arith.addf %335, %337 : vector<2x32xf32>
    %339 = vector.extract_strided_slice %331 {offsets = [0, 64], sizes = [2, 32], strides = [1, 1]} : vector<2x96xf32> to vector<2x32xf32>
    %340 = math.tanh %338 : vector<2x32xf32>
    %341 = arith.mulf %339, %340 : vector<2x32xf32>
    %cst_123 = arith.constant dense<0.000000e+00> : vector<2x128xf32>
    %342 = tpu.matmul %341, %0, %cst_123 {dimension_numbers = #tpu.dot_dimension_numbers<[1], [0], [0], [1], [0, 0, 1, 1], [], []>} : vector<2x32xf32>, vector<32x128xf32>, vector<2x128xf32> -> vector<2x128xf32>
    %343 = vector.broadcast %1 : vector<1x128xf32> to vector<2x128xf32>
    %344 = arith.addf %342, %343 : vector<2x128xf32>
    %c3_124 = arith.constant 3 : index
    %c0_125 = arith.constant 0 : index
    %c0_126 = arith.constant 0 : index
    %345 = vector.load %arg10[%c3_124, %c0_125, %c0_126] : memref<8x2x128xf32, #tpu.memory_space<vmem>>, vector<1x2x128xf32>
    %346 = vector.shape_cast %345 : vector<1x2x128xf32> to vector<2x128xf32>
    %347 = vector.shape_cast %344 : vector<2x128xf32> to vector<1x2x128xf32>
    tpu.vector_store %arg10[%c3_124, %c0_125, %c0_126], %347 {strides = array<i32>} : memref<8x2x128xf32, #tpu.memory_space<vmem>>, vector<1x2x128xf32>,
    %c4_127 = arith.constant 4 : index
    %c0_128 = arith.constant 0 : index
    %c0_129 = arith.constant 0 : index
    %348 = vector.load %arg11[%c4_127, %c0_128, %c0_129] : memref<8x2x128xf32, #tpu.memory_space<vmem>>, vector<1x2x128xf32>
    %349 = vector.shape_cast %348 : vector<1x2x128xf32> to vector<2x128xf32>
    %cst_130 = arith.constant dense<0.000000e+00> : vector<2x128xf32>
    %350 = tpu.matmul %341, %241, %cst_130 {dimension_numbers = #tpu.dot_dimension_numbers<[1], [0], [0], [1], [0, 0, 1, 1], [], []>} : vector<2x32xf32>, vector<32x128xf32>, vector<2x128xf32> -> vector<2x128xf32>
    %351 = arith.addf %349, %350 : vector<2x128xf32>
    %352 = vector.extract_strided_slice %351 {offsets = [0, 0], sizes = [2, 96], strides = [1, 1]} : vector<2x128xf32> to vector<2x96xf32>
    %353 = arith.negf %352 : vector<2x96xf32>
    %354 = math.exp %353 : vector<2x96xf32>
    %cst_131 = arith.constant 1.000000e+00 : f32
    %355 = vector.broadcast %cst_131 : f32 to vector<2x96xf32>
    %356 = arith.addf %355, %354 : vector<2x96xf32>
    %357 = arith.divf %355, %356 : vector<2x96xf32>
    %358 = vector.extract_strided_slice %351 {offsets = [0, 96], sizes = [2, 32], strides = [1, 1]} : vector<2x128xf32> to vector<2x32xf32>
    %359 = math.tanh %358 : vector<2x32xf32>
    %360 = vector.extract_strided_slice %357 {offsets = [0, 32], sizes = [2, 32], strides = [1, 1]} : vector<2x96xf32> to vector<2x32xf32>
    %361 = arith.mulf %360, %338 : vector<2x32xf32>
    %362 = vector.extract_strided_slice %357 {offsets = [0, 0], sizes = [2, 32], strides = [1, 1]} : vector<2x96xf32> to vector<2x32xf32>
    %363 = arith.mulf %362, %359 : vector<2x32xf32>
    %364 = arith.addf %361, %363 : vector<2x32xf32>
    %365 = vector.extract_strided_slice %357 {offsets = [0, 64], sizes = [2, 32], strides = [1, 1]} : vector<2x96xf32> to vector<2x32xf32>
    %366 = math.tanh %364 : vector<2x32xf32>
    %367 = arith.mulf %365, %366 : vector<2x32xf32>
    %cst_132 = arith.constant dense<0.000000e+00> : vector<2x128xf32>
    %368 = tpu.matmul %367, %0, %cst_132 {dimension_numbers = #tpu.dot_dimension_numbers<[1], [0], [0], [1], [0, 0, 1, 1], [], []>} : vector<2x32xf32>, vector<32x128xf32>, vector<2x128xf32> -> vector<2x128xf32>
    %369 = vector.broadcast %1 : vector<1x128xf32> to vector<2x128xf32>
    %370 = arith.addf %368, %369 : vector<2x128xf32>
    %c4_133 = arith.constant 4 : index
    %c0_134 = arith.constant 0 : index
    %c0_135 = arith.constant 0 : index
    %371 = vector.load %arg10[%c4_133, %c0_134, %c0_135] : memref<8x2x128xf32, #tpu.memory_space<vmem>>, vector<1x2x128xf32>
    %372 = vector.shape_cast %371 : vector<1x2x128xf32> to vector<2x128xf32>
    %373 = vector.shape_cast %370 : vector<2x128xf32> to vector<1x2x128xf32>
    tpu.vector_store %arg10[%c4_133, %c0_134, %c0_135], %373 {strides = array<i32>} : memref<8x2x128xf32, #tpu.memory_space<vmem>>, vector<1x2x128xf32>,
    %c5_136 = arith.constant 5 : index
    %c0_137 = arith.constant 0 : index
    %c0_138 = arith.constant 0 : index
    %374 = vector.load %arg11[%c5_136, %c0_137, %c0_138] : memref<8x2x128xf32, #tpu.memory_space<vmem>>, vector<1x2x128xf32>
    %375 = vector.shape_cast %374 : vector<1x2x128xf32> to vector<2x128xf32>
    %cst_139 = arith.constant dense<0.000000e+00> : vector<2x128xf32>
    %376 = tpu.matmul %367, %241, %cst_139 {dimension_numbers = #tpu.dot_dimension_numbers<[1], [0], [0], [1], [0, 0, 1, 1], [], []>} : vector<2x32xf32>, vector<32x128xf32>, vector<2x128xf32> -> vector<2x128xf32>
    %377 = arith.addf %375, %376 : vector<2x128xf32>
    %378 = vector.extract_strided_slice %377 {offsets = [0, 0], sizes = [2, 96], strides = [1, 1]} : vector<2x128xf32> to vector<2x96xf32>
    %379 = arith.negf %378 : vector<2x96xf32>
    %380 = math.exp %379 : vector<2x96xf32>
    %cst_140 = arith.constant 1.000000e+00 : f32
    %381 = vector.broadcast %cst_140 : f32 to vector<2x96xf32>
    %382 = arith.addf %381, %380 : vector<2x96xf32>
    %383 = arith.divf %381, %382 : vector<2x96xf32>
    %384 = vector.extract_strided_slice %377 {offsets = [0, 96], sizes = [2, 32], strides = [1, 1]} : vector<2x128xf32> to vector<2x32xf32>
    %385 = math.tanh %384 : vector<2x32xf32>
    %386 = vector.extract_strided_slice %383 {offsets = [0, 32], sizes = [2, 32], strides = [1, 1]} : vector<2x96xf32> to vector<2x32xf32>
    %387 = arith.mulf %386, %364 : vector<2x32xf32>
    %388 = vector.extract_strided_slice %383 {offsets = [0, 0], sizes = [2, 32], strides = [1, 1]} : vector<2x96xf32> to vector<2x32xf32>
    %389 = arith.mulf %388, %385 : vector<2x32xf32>
    %390 = arith.addf %387, %389 : vector<2x32xf32>
    %391 = vector.extract_strided_slice %383 {offsets = [0, 64], sizes = [2, 32], strides = [1, 1]} : vector<2x96xf32> to vector<2x32xf32>
    %392 = math.tanh %390 : vector<2x32xf32>
    %393 = arith.mulf %391, %392 : vector<2x32xf32>
    %cst_141 = arith.constant dense<0.000000e+00> : vector<2x128xf32>
    %394 = tpu.matmul %393, %0, %cst_141 {dimension_numbers = #tpu.dot_dimension_numbers<[1], [0], [0], [1], [0, 0, 1, 1], [], []>} : vector<2x32xf32>, vector<32x128xf32>, vector<2x128xf32> -> vector<2x128xf32>
    %395 = vector.broadcast %1 : vector<1x128xf32> to vector<2x128xf32>
    %396 = arith.addf %394, %395 : vector<2x128xf32>
    %c5_142 = arith.constant 5 : index
    %c0_143 = arith.constant 0 : index
    %c0_144 = arith.constant 0 : index
    %397 = vector.load %arg10[%c5_142, %c0_143, %c0_144] : memref<8x2x128xf32, #tpu.memory_space<vmem>>, vector<1x2x128xf32>
    %398 = vector.shape_cast %397 : vector<1x2x128xf32> to vector<2x128xf32>
    %399 = vector.shape_cast %396 : vector<2x128xf32> to vector<1x2x128xf32>
    tpu.vector_store %arg10[%c5_142, %c0_143, %c0_144], %399 {strides = array<i32>} : memref<8x2x128xf32, #tpu.memory_space<vmem>>, vector<1x2x128xf32>,
    %c6_145 = arith.constant 6 : index
    %c0_146 = arith.constant 0 : index
    %c0_147 = arith.constant 0 : index
    %400 = vector.load %arg11[%c6_145, %c0_146, %c0_147] : memref<8x2x128xf32, #tpu.memory_space<vmem>>, vector<1x2x128xf32>
    %401 = vector.shape_cast %400 : vector<1x2x128xf32> to vector<2x128xf32>
    %cst_148 = arith.constant dense<0.000000e+00> : vector<2x128xf32>
    %402 = tpu.matmul %393, %241, %cst_148 {dimension_numbers = #tpu.dot_dimension_numbers<[1], [0], [0], [1], [0, 0, 1, 1], [], []>} : vector<2x32xf32>, vector<32x128xf32>, vector<2x128xf32> -> vector<2x128xf32>
    %403 = arith.addf %401, %402 : vector<2x128xf32>
    %404 = vector.extract_strided_slice %403 {offsets = [0, 0], sizes = [2, 96], strides = [1, 1]} : vector<2x128xf32> to vector<2x96xf32>
    %405 = arith.negf %404 : vector<2x96xf32>
    %406 = math.exp %405 : vector<2x96xf32>
    %cst_149 = arith.constant 1.000000e+00 : f32
    %407 = vector.broadcast %cst_149 : f32 to vector<2x96xf32>
    %408 = arith.addf %407, %406 : vector<2x96xf32>
    %409 = arith.divf %407, %408 : vector<2x96xf32>
    %410 = vector.extract_strided_slice %403 {offsets = [0, 96], sizes = [2, 32], strides = [1, 1]} : vector<2x128xf32> to vector<2x32xf32>
    %411 = math.tanh %410 : vector<2x32xf32>
    %412 = vector.extract_strided_slice %409 {offsets = [0, 32], sizes = [2, 32], strides = [1, 1]} : vector<2x96xf32> to vector<2x32xf32>
    %413 = arith.mulf %412, %390 : vector<2x32xf32>
    %414 = vector.extract_strided_slice %409 {offsets = [0, 0], sizes = [2, 32], strides = [1, 1]} : vector<2x96xf32> to vector<2x32xf32>
    %415 = arith.mulf %414, %411 : vector<2x32xf32>
    %416 = arith.addf %413, %415 : vector<2x32xf32>
    %417 = vector.extract_strided_slice %409 {offsets = [0, 64], sizes = [2, 32], strides = [1, 1]} : vector<2x96xf32> to vector<2x32xf32>
    %418 = math.tanh %416 : vector<2x32xf32>
    %419 = arith.mulf %417, %418 : vector<2x32xf32>
    %cst_150 = arith.constant dense<0.000000e+00> : vector<2x128xf32>
    %420 = tpu.matmul %419, %0, %cst_150 {dimension_numbers = #tpu.dot_dimension_numbers<[1], [0], [0], [1], [0, 0, 1, 1], [], []>} : vector<2x32xf32>, vector<32x128xf32>, vector<2x128xf32> -> vector<2x128xf32>
    %421 = vector.broadcast %1 : vector<1x128xf32> to vector<2x128xf32>
    %422 = arith.addf %420, %421 : vector<2x128xf32>
    %c6_151 = arith.constant 6 : index
    %c0_152 = arith.constant 0 : index
    %c0_153 = arith.constant 0 : index
    %423 = vector.load %arg10[%c6_151, %c0_152, %c0_153] : memref<8x2x128xf32, #tpu.memory_space<vmem>>, vector<1x2x128xf32>
    %424 = vector.shape_cast %423 : vector<1x2x128xf32> to vector<2x128xf32>
    %425 = vector.shape_cast %422 : vector<2x128xf32> to vector<1x2x128xf32>
    tpu.vector_store %arg10[%c6_151, %c0_152, %c0_153], %425 {strides = array<i32>} : memref<8x2x128xf32, #tpu.memory_space<vmem>>, vector<1x2x128xf32>,
    %c7_154 = arith.constant 7 : index
    %c0_155 = arith.constant 0 : index
    %c0_156 = arith.constant 0 : index
    %426 = vector.load %arg11[%c7_154, %c0_155, %c0_156] : memref<8x2x128xf32, #tpu.memory_space<vmem>>, vector<1x2x128xf32>
    %427 = vector.shape_cast %426 : vector<1x2x128xf32> to vector<2x128xf32>
    %cst_157 = arith.constant dense<0.000000e+00> : vector<2x128xf32>
    %428 = tpu.matmul %419, %241, %cst_157 {dimension_numbers = #tpu.dot_dimension_numbers<[1], [0], [0], [1], [0, 0, 1, 1], [], []>} : vector<2x32xf32>, vector<32x128xf32>, vector<2x128xf32> -> vector<2x128xf32>
    %429 = arith.addf %427, %428 : vector<2x128xf32>
    %430 = vector.extract_strided_slice %429 {offsets = [0, 0], sizes = [2, 96], strides = [1, 1]} : vector<2x128xf32> to vector<2x96xf32>
    %431 = arith.negf %430 : vector<2x96xf32>
    %432 = math.exp %431 : vector<2x96xf32>
    %cst_158 = arith.constant 1.000000e+00 : f32
    %433 = vector.broadcast %cst_158 : f32 to vector<2x96xf32>
    %434 = arith.addf %433, %432 : vector<2x96xf32>
    %435 = arith.divf %433, %434 : vector<2x96xf32>
    %436 = vector.extract_strided_slice %429 {offsets = [0, 96], sizes = [2, 32], strides = [1, 1]} : vector<2x128xf32> to vector<2x32xf32>
    %437 = math.tanh %436 : vector<2x32xf32>
    %438 = vector.extract_strided_slice %435 {offsets = [0, 32], sizes = [2, 32], strides = [1, 1]} : vector<2x96xf32> to vector<2x32xf32>
    %439 = arith.mulf %438, %416 : vector<2x32xf32>
    %440 = vector.extract_strided_slice %435 {offsets = [0, 0], sizes = [2, 32], strides = [1, 1]} : vector<2x96xf32> to vector<2x32xf32>
    %441 = arith.mulf %440, %437 : vector<2x32xf32>
    %442 = arith.addf %439, %441 : vector<2x32xf32>
    %443 = vector.extract_strided_slice %435 {offsets = [0, 64], sizes = [2, 32], strides = [1, 1]} : vector<2x96xf32> to vector<2x32xf32>
    %444 = math.tanh %442 : vector<2x32xf32>
    %445 = arith.mulf %443, %444 : vector<2x32xf32>
    %cst_159 = arith.constant dense<0.000000e+00> : vector<2x128xf32>
    %446 = tpu.matmul %445, %0, %cst_159 {dimension_numbers = #tpu.dot_dimension_numbers<[1], [0], [0], [1], [0, 0, 1, 1], [], []>} : vector<2x32xf32>, vector<32x128xf32>, vector<2x128xf32> -> vector<2x128xf32>
    %447 = vector.broadcast %1 : vector<1x128xf32> to vector<2x128xf32>
    %448 = arith.addf %446, %447 : vector<2x128xf32>
    %c7_160 = arith.constant 7 : index
    %c0_161 = arith.constant 0 : index
    %c0_162 = arith.constant 0 : index
    %449 = vector.load %arg10[%c7_160, %c0_161, %c0_162] : memref<8x2x128xf32, #tpu.memory_space<vmem>>, vector<1x2x128xf32>
    %450 = vector.shape_cast %449 : vector<1x2x128xf32> to vector<2x128xf32>
    %451 = vector.shape_cast %448 : vector<2x128xf32> to vector<1x2x128xf32>
    tpu.vector_store %arg10[%c7_160, %c0_161, %c0_162], %451 {strides = array<i32>} : memref<8x2x128xf32, #tpu.memory_space<vmem>>, vector<1x2x128xf32>,
    return
  }
  func.func @transform_0(%arg0: i32) -> (i32, i32, i32) {
    %c0_i32 = arith.constant 0 : i32
    %c0_i32_0 = arith.constant 0 : i32
    %c0_i32_1 = arith.constant 0 : i32
    return %c0_i32, %arg0, %c0_i32_0 : i32, i32, i32
  }
  func.func @transform_1(%arg0: i32) -> (i32, i32) {
    %c0_i32 = arith.constant 0 : i32
    %c0_i32_0 = arith.constant 0 : i32
    %c0_i32_1 = arith.constant 0 : i32
    return %c0_i32, %c0_i32_0 : i32, i32
  }
  func.func @transform_2(%arg0: i32) -> (i32, i32) {
    %c0_i32 = arith.constant 0 : i32
    %c0_i32_0 = arith.constant 0 : i32
    %c0_i32_1 = arith.constant 0 : i32
    return %c0_i32, %c0_i32_0 : i32, i32
  }
  func.func @transform_3(%arg0: i32) -> (i32, i32) {
    %c0_i32 = arith.constant 0 : i32
    %c0_i32_0 = arith.constant 0 : i32
    %c0_i32_1 = arith.constant 0 : i32
    return %c0_i32, %c0_i32_0 : i32, i32
  }
  func.func @transform_4(%arg0: i32) -> (i32, i32) {
    %c0_i32 = arith.constant 0 : i32
    %c0_i32_0 = arith.constant 0 : i32
    %c0_i32_1 = arith.constant 0 : i32
    return %c0_i32, %c0_i32_0 : i32, i32
  }
  func.func @transform_5(%arg0: i32) -> (i32, i32) {
    %c0_i32 = arith.constant 0 : i32
    %c0_i32_0 = arith.constant 0 : i32
    %c0_i32_1 = arith.constant 0 : i32
    return %c0_i32, %c0_i32_0 : i32, i32
  }
  func.func @transform_6(%arg0: i32) -> (i32, i32) {
    %c0_i32 = arith.constant 0 : i32
    %c0_i32_0 = arith.constant 0 : i32
    %c0_i32_1 = arith.constant 0 : i32
    return %c0_i32, %c0_i32_0 : i32, i32
  }
  func.func @transform_7(%arg0: i32) -> (i32, i32) {
    %c0_i32 = arith.constant 0 : i32
    %c0_i32_0 = arith.constant 0 : i32
    %c0_i32_1 = arith.constant 0 : i32
    return %c0_i32, %c0_i32_0 : i32, i32
  }
  func.func @transform_8(%arg0: i32) -> (i32, i32) {
    %c0_i32 = arith.constant 0 : i32
    %c0_i32_0 = arith.constant 0 : i32
    %c0_i32_1 = arith.constant 0 : i32
    return %c0_i32, %c0_i32_0 : i32, i32
  }
  func.func @transform_9(%arg0: i32) -> (i32, i32, i32) {
    %c0_i32 = arith.constant 0 : i32
    %c0_i32_0 = arith.constant 0 : i32
    %c0_i32_1 = arith.constant 0 : i32
    return %c0_i32, %arg0, %c0_i32_0 : i32, i32, i32
  }
}

</mosaic_0001>

<llo_original>
// kernel: lstm_model_forward.1
$region0: #{lstm_model_forward.1}
  #allocation0 [shape = 'u32[]', space=smem, size = 0x4, offset = 0x4, fixed_abs, tag = 'smem constant byte address 0x4 - core index']
  #allocation1 [shape = 'u32[72,128]{1,0:T(1,128)}', space=vmem, size = 0x9000, scoped, tag = 'internal scratch']
  #allocation2 [shape = 'f32[8,2,128]{2,1,0:T(2,128)}', space=vmem, size = 0x2000, scoped, tag = 'scratch operand']
  %s0 = inlined_call_operand.vmem [shape: f32[8,2,16], index: 0, kind: input, shape index: {}]
  %s1 = inlined_call_operand.vmem [shape: f32[16,128], index: 1, kind: input, shape index: {}]
  %s2 = inlined_call_operand.vmem [shape: f32[32,128], index: 2, kind: input, shape index: {}]
  %s3 = inlined_call_operand.vmem [shape: f32[1,128], index: 3, kind: input, shape index: {}]
  %s4 = inlined_call_operand.vmem [shape: f32[32,128], index: 4, kind: input, shape index: {}]
  %s5 = inlined_call_operand.vmem [shape: f32[32,128], index: 5, kind: input, shape index: {}]
  %s6 = inlined_call_operand.vmem [shape: f32[1,128], index: 6, kind: input, shape index: {}]
  %s7 = inlined_call_operand.vmem [shape: f32[32,128], index: 7, kind: input, shape index: {}]
  %s8 = inlined_call_operand.vmem [shape: f32[1,128], index: 8, kind: input, shape index: {}]
  %s9 = inlined_call_operand.vmem [shape: f32[8,2,128], index: 9, kind: output, shape index: {}]
  %s10 = sld [smem:[#allocation0]]
  $region46: #{lstm_model_forward.1} parent=0
    _
  %s12 = ssub.s32 1, %s10
  %s13 = scalar_select 0, %s12, %s10
  // Predicated region
  $region2: #{lstm_model_forward.1} parent=0 // pred_check
    _
  $region3: #{lstm_model_forward.1} parent=0 // pred_check_branch
    %15 = sbr.rel (0) target = $region5
  $region4: #{lstm_model_forward.1} parent=0 // pred_region
    _
  $region5: #{lstm_model_forward.1} parent=0 // pred_fallthru
    _
  // Predicated region
  $region6: #{lstm_model_forward.1} parent=0 // pred_check
    _
  $region7: #{lstm_model_forward.1} parent=0 // pred_check_branch
    %17 = sbr.rel (0) target = $region9
  $region8: #{lstm_model_forward.1} parent=0 // pred_region
    _
  $region9: #{lstm_model_forward.1} parent=0 // pred_fallthru
    _
  // Predicated region
  $region10: #{lstm_model_forward.1} parent=0 // pred_check
    _
  $region11: #{lstm_model_forward.1} parent=0 // pred_check_branch
    %19 = sbr.rel (0) target = $region13
  $region12: #{lstm_model_forward.1} parent=0 // pred_region
    _
  $region13: #{lstm_model_forward.1} parent=0 // pred_fallthru
    _
  // Predicated region
  $region14: #{lstm_model_forward.1} parent=0 // pred_check
    _
  $region15: #{lstm_model_forward.1} parent=0 // pred_check_branch
    %21 = sbr.rel (0) target = $region17
  $region16: #{lstm_model_forward.1} parent=0 // pred_region
    _
  $region17: #{lstm_model_forward.1} parent=0 // pred_fallthru
    _
  // Predicated region
  $region18: #{lstm_model_forward.1} parent=0 // pred_check
    _
  $region19: #{lstm_model_forward.1} parent=0 // pred_check_branch
    %23 = sbr.rel (0) target = $region21
  $region20: #{lstm_model_forward.1} parent=0 // pred_region
    _
  $region21: #{lstm_model_forward.1} parent=0 // pred_fallthru
    _
  // Predicated region
  $region22: #{lstm_model_forward.1} parent=0 // pred_check
    _
  $region23: #{lstm_model_forward.1} parent=0 // pred_check_branch
    %25 = sbr.rel (0) target = $region25
  $region24: #{lstm_model_forward.1} parent=0 // pred_region
    _
  $region25: #{lstm_model_forward.1} parent=0 // pred_fallthru
    _
  // Predicated region
  $region26: #{lstm_model_forward.1} parent=0 // pred_check
    _
  $region27: #{lstm_model_forward.1} parent=0 // pred_check_branch
    %27 = sbr.rel (0) target = $region29
  $region28: #{lstm_model_forward.1} parent=0 // pred_region
    _
  $region29: #{lstm_model_forward.1} parent=0 // pred_fallthru
    _
  // Predicated region
  $region30: #{lstm_model_forward.1} parent=0 // pred_check
    _
  $region31: #{lstm_model_forward.1} parent=0 // pred_check_branch
    %29 = sbr.rel (0) target = $region33
  $region32: #{lstm_model_forward.1} parent=0 // pred_region
    _
  $region33: #{lstm_model_forward.1} parent=0 // pred_fallthru
    _
  // Predicated region
  $region34: #{lstm_model_forward.1} parent=0 // pred_check
    _
  $region35: #{lstm_model_forward.1} parent=0 // pred_check_branch
    %31 = sbr.rel (0) target = $region37
  $region36: #{lstm_model_forward.1} parent=0 // pred_region
    _
  $region37: #{lstm_model_forward.1} parent=0 // pred_fallthru
    _
  %v32 = vld [vmem:[%s7] sm:$0xff]
  %v33 = vld [vmem:[%s7 + $0x8] sm:$0xff]
  %v34 = vld [vmem:[%s7 + $0x10] sm:$0xff]
  %v35 = vld [vmem:[%s7 + $0x18] sm:$0xff]
  %v36 = vld [vmem:[%s8] sm:$0x1]
  %v37 = vld [vmem:[%s2] sm:$0xff]
  %v38 = vld [vmem:[%s2 + $0x8] sm:$0xff]
  %v39 = vld [vmem:[%s2 + $0x10] sm:$0xff]
  %v40 = vld [vmem:[%s2 + $0x18] sm:$0xff]
  %v41 = vld [vmem:[%s1] sm:$0xff]
  %v42 = vld [vmem:[%s1 + $0x8] sm:$0xff]
  %v43 = vld [vmem:[%s3] sm:$0x1]
  %v44 = vld [vmem:[%s4] sm:$0xff]
  %v45 = vld [vmem:[%s4 + $0x8] sm:$0xff]
  %v46 = vld [vmem:[%s4 + $0x10] sm:$0xff]
  %v47 = vld [vmem:[%s4 + $0x18] sm:$0xff]
  %v48 = vld [vmem:[%s6] sm:$0x1]
  %v49 = vld [vmem:[%s0] sm:$0x3]
  %v51 = vperm.slane %v43, 0
  %vm53 = vcmask 130048
  %v55 = vsel %vm53, %v49, 0
  %57 = vmatpush.msra.mxu0 0.0
  %58 = vmatpush.msra.mxu0 0.0
  %59 = vmatpush.msra.mxu0 0.0
  %60 = vmatpush.msra.mxu0 0.0
  %61 = vmatpush.msra.mxu0 0.0
  %62 = vmatpush.msra.mxu0 0.0
  %63 = vmatpush.msra.mxu0 0.0
  %64 = vmatpush.msra.mxu0 0.0
  %65 = vmatpush.msra.mxu0 0.0
  %66 = vmatpush.msra.mxu0 0.0
  %67 = vmatpush.msra.mxu0 0.0
  %68 = vmatpush.msra.mxu0 0.0
  %69 = vmatpush.msra.mxu0 0.0
  %70 = vmatpush.msra.mxu0 0.0
  %71 = vmatpush.msra.mxu0 %v42
  %72 = vmatpush.msra.mxu0 %v41
  %73 = vmatmul.f32.gmra.mxu0 %v55
  %v74 = vpop.f32.mrf.mxu0
  %v75 = vadd.f32 %v51, %v74
  %76 = vdwg.mxu0
  %vm77 = vcmask 261120
  %v79 = vsel %vm77, 0.0, 0
  %81 = vmatpush.msra.mxu0 0.0
  %82 = vmatpush.msra.mxu0 0.0
  %83 = vmatpush.msra.mxu0 0.0
  %84 = vmatpush.msra.mxu0 0.0
  %85 = vmatpush.msra.mxu0 0.0
  %86 = vmatpush.msra.mxu0 0.0
  %87 = vmatpush.msra.mxu0 0.0
  %88 = vmatpush.msra.mxu0 0.0
  %89 = vmatpush.msra.mxu0 0.0
  %90 = vmatpush.msra.mxu0 0.0
  %91 = vmatpush.msra.mxu0 0.0
  %92 = vmatpush.msra.mxu0 0.0
  %93 = vmatpush.msra.mxu0 %v40
  %94 = vmatpush.msra.mxu0 %v39
  %95 = vmatpush.msra.mxu0 %v38
  %96 = vmatpush.msra.mxu0 %v37
  %97 = vmatmul.f32.gmra.mxu0 %v79
  %v98 = vpop.f32.mrf.mxu0
  %v99 = vadd.f32 0.0, %v98
  %100 = vdwg.mxu0
  %v101 = vadd.f32 %v75, %v99
  %v102 = vxor.u32 %v101, 2147483648
  %v103 = vmul.f32 %v102, 1.442695
  %v104 = vpow.pop %v103
  %v105 = vadd.f32 %v104, 1.0
  %v106 = vrcp.pop %v105
  %v107 = vmul.f32 %v105, %v106
  %v108 = vsub.f32 1.0, %v107
  %v109 = vmul.f32 %v106, %v108
  %v110 = vadd.f32 %v106, %v109
  %vm111 = vweird.f32 %v105
  %vm112 = vweird.f32 %v106
  %vm113 = vmor %vm111, %vm112
  %v114 = vsel %vm113, %v106, %v110
  %v115 = vand.u32 2147483647, %v105
  %vm116 = vcmp.eq.f32.partialorder %v115, 8.507059e+37
  %v117 = vand.u32 %v105, 2147483648
  %v118 = vor.u32 1.1754944e-38, %v117
  %v119 = vsel %vm116, %v118, %v114
  %v120 = vmul.f32 1.0, %v119
  %v121 = vtanh.pop %v101
  %v122 = vmul.f32 %v120, 0.0
  %124 = vrot.lane.b32.xlu0 %v121, 32
  %v125 = vpop.permute.xlu0 %124
  %v127 = vmul.f32 %v120, %v125
  %129 = vrot.lane.b32.xlu0 %v127, 32
  %v130 = vpop.permute.xlu0 %129
  %v132 = vadd.f32 %v122, %v130
  %v133 = vtanh.pop %v132
  %135 = vrot.lane.b32.xlu0 %v133, 32
  %v136 = vpop.permute.xlu0 %135
  %v138 = vmul.f32 %v120, %v136
  %v140 = vperm.slane %v48, 0
  %143 = vrot.lane.b32.xlu0 %v138, 64
  %v144 = vpop.permute.xlu0 %143
  %v145 = vsel %vm77, %v144, 0
  %147 = vmatpush.msra.mxu0 0.0
  %148 = vmatpush.msra.mxu0 0.0
  %149 = vmatpush.msra.mxu0 0.0
  %150 = vmatpush.msra.mxu0 0.0
  %151 = vmatpush.msra.mxu0 0.0
  %152 = vmatpush.msra.mxu0 0.0
  %153 = vmatpush.msra.mxu0 0.0
  %154 = vmatpush.msra.mxu0 0.0
  %155 = vmatpush.msra.mxu0 0.0
  %156 = vmatpush.msra.mxu0 0.0
  %157 = vmatpush.msra.mxu0 0.0
  %158 = vmatpush.msra.mxu0 0.0
  %159 = vmatpush.msra.mxu0 %v47
  %160 = vmatpush.msra.mxu0 %v46
  %161 = vmatpush.msra.mxu0 %v45
  %162 = vmatpush.msra.mxu0 %v44
  %163 = vmatmul.f32.gmra.mxu0 %v145
  %v164 = vpop.f32.mrf.mxu0
  %v165 = vadd.f32 %v140, %v164
  %166 = vdwg.mxu0
  %167 = vst [vmem:[#allocation2] sm:$0x3] %v165
  %s168 = scalar_lea.vmem %s0, 2
  %v169 = vld [vmem:[%s168] sm:$0x3]
  %v171 = vsel %vm53, %v169, 0
  %173 = vmatpush.msra.mxu0 0.0
  %174 = vmatpush.msra.mxu0 0.0
  %175 = vmatpush.msra.mxu0 0.0
  %176 = vmatpush.msra.mxu0 0.0
  %177 = vmatpush.msra.mxu0 0.0
  %178 = vmatpush.msra.mxu0 0.0
  %179 = vmatpush.msra.mxu0 0.0
  %180 = vmatpush.msra.mxu0 0.0
  %181 = vmatpush.msra.mxu0 0.0
  %182 = vmatpush.msra.mxu0 0.0
  %183 = vmatpush.msra.mxu0 0.0
  %184 = vmatpush.msra.mxu0 0.0
  %185 = vmatpush.msra.mxu0 0.0
  %186 = vmatpush.msra.mxu0 0.0
  %187 = vmatpush.msra.mxu0 %v42
  %188 = vmatpush.msra.mxu0 %v41
  %189 = vmatmul.f32.gmra.mxu0 %v171
  %v190 = vpop.f32.mrf.mxu0
  %v191 = vadd.f32 %v51, %v190
  %192 = vdwg.mxu0
  %193 = vmatpush.msra.mxu0 0.0
  %194 = vmatpush.msra.mxu0 0.0
  %195 = vmatpush.msra.mxu0 0.0
  %196 = vmatpush.msra.mxu0 0.0
  %197 = vmatpush.msra.mxu0 0.0
  %198 = vmatpush.msra.mxu0 0.0
  %199 = vmatpush.msra.mxu0 0.0
  %200 = vmatpush.msra.mxu0 0.0
  %201 = vmatpush.msra.mxu0 0.0
  %202 = vmatpush.msra.mxu0 0.0
  %203 = vmatpush.msra.mxu0 0.0
  %204 = vmatpush.msra.mxu0 0.0
  %205 = vmatpush.msra.mxu0 %v40
  %206 = vmatpush.msra.mxu0 %v39
  %207 = vmatpush.msra.mxu0 %v38
  %208 = vmatpush.msra.mxu0 %v37
  %209 = vmatmul.f32.gmra.mxu0 %v145
  %v210 = vpop.f32.mrf.mxu0
  %v211 = vadd.f32 0.0, %v210
  %212 = vdwg.mxu0
  %v213 = vadd.f32 %v191, %v211
  %v214 = vxor.u32 %v213, 2147483648
  %v215 = vmul.f32 %v214, 1.442695
  %v216 = vpow.pop %v215
  %v217 = vadd.f32 %v216, 1.0
  %v218 = vrcp.pop %v217
  %v219 = vmul.f32 %v217, %v218
  %v220 = vsub.f32 1.0, %v219
  %v221 = vmul.f32 %v218, %v220
  %v222 = vadd.f32 %v218, %v221
  %vm223 = vweird.f32 %v217
  %vm224 = vweird.f32 %v218
  %vm225 = vmor %vm223, %vm224
  %v226 = vsel %vm225, %v218, %v222
  %v227 = vand.u32 2147483647, %v217
  %vm228 = vcmp.eq.f32.partialorder %v227, 8.507059e+37
  %v229 = vand.u32 %v217, 2147483648
  %v230 = vor.u32 1.1754944e-38, %v229
  %v231 = vsel %vm228, %v230, %v226
  %v232 = vmul.f32 1.0, %v231
  %v233 = vtanh.pop %v213
  %v234 = vmul.f32 %v232, %v132
  %236 = vrot.lane.b32.xlu0 %v233, 32
  %v237 = vpop.permute.xlu0 %236
  %v239 = vmul.f32 %v232, %v237
  %241 = vrot.lane.b32.xlu0 %v239, 32
  %v242 = vpop.permute.xlu0 %241
  %v244 = vadd.f32 %v234, %v242
  %v245 = vtanh.pop %v244
  %247 = vrot.lane.b32.xlu0 %v245, 32
  %v248 = vpop.permute.xlu0 %247
  %v250 = vmul.f32 %v232, %v248
  %252 = vrot.lane.b32.xlu0 %v250, 64
  %v253 = vpop.permute.xlu0 %252
  %v254 = vsel %vm77, %v253, 0
  %256 = vmatpush.msra.mxu0 0.0
  %257 = vmatpush.msra.mxu0 0.0
  %258 = vmatpush.msra.mxu0 0.0
  %259 = vmatpush.msra.mxu0 0.0
  %260 = vmatpush.msra.mxu0 0.0
  %261 = vmatpush.msra.mxu0 0.0
  %262 = vmatpush.msra.mxu0 0.0
  %263 = vmatpush.msra.mxu0 0.0
  %264 = vmatpush.msra.mxu0 0.0
  %265 = vmatpush.msra.mxu0 0.0
  %266 = vmatpush.msra.mxu0 0.0
  %267 = vmatpush.msra.mxu0 0.0
  %268 = vmatpush.msra.mxu0 %v47
  %269 = vmatpush.msra.mxu0 %v46
  %270 = vmatpush.msra.mxu0 %v45
  %271 = vmatpush.msra.mxu0 %v44
  %272 = vmatmul.f32.gmra.mxu0 %v254
  %v273 = vpop.f32.mrf.mxu0
  %v274 = vadd.f32 %v140, %v273
  %275 = vdwg.mxu0
  %s276 = scalar_lea.vmem [#allocation2], 2
  %277 = vst [vmem:[%s276] sm:$0x3] %v274
  %s278 = scalar_lea.vmem %s0, 4
  %v279 = vld [vmem:[%s278] sm:$0x3]
  %v281 = vsel %vm53, %v279, 0
  %283 = vmatpush.msra.mxu0 0.0
  %284 = vmatpush.msra.mxu0 0.0
  %285 = vmatpush.msra.mxu0 0.0
  %286 = vmatpush.msra.mxu0 0.0
  %287 = vmatpush.msra.mxu0 0.0
  %288 = vmatpush.msra.mxu0 0.0
  %289 = vmatpush.msra.mxu0 0.0
  %290 = vmatpush.msra.mxu0 0.0
  %291 = vmatpush.msra.mxu0 0.0
  %292 = vmatpush.msra.mxu0 0.0
  %293 = vmatpush.msra.mxu0 0.0
  %294 = vmatpush.msra.mxu0 0.0
  %295 = vmatpush.msra.mxu0 0.0
  %296 = vmatpush.msra.mxu0 0.0
  %297 = vmatpush.msra.mxu0 %v42
  %298 = vmatpush.msra.mxu0 %v41
  %299 = vmatmul.f32.gmra.mxu0 %v281
  %v300 = vpop.f32.mrf.mxu0
  %v301 = vadd.f32 %v51, %v300
  %302 = vdwg.mxu0
  %303 = vmatpush.msra.mxu0 0.0
  %304 = vmatpush.msra.mxu0 0.0
  %305 = vmatpush.msra.mxu0 0.0
  %306 = vmatpush.msra.mxu0 0.0
  %307 = vmatpush.msra.mxu0 0.0
  %308 = vmatpush.msra.mxu0 0.0
  %309 = vmatpush.msra.mxu0 0.0
  %310 = vmatpush.msra.mxu0 0.0
  %311 = vmatpush.msra.mxu0 0.0
  %312 = vmatpush.msra.mxu0 0.0
  %313 = vmatpush.msra.mxu0 0.0
  %314 = vmatpush.msra.mxu0 0.0
  %315 = vmatpush.msra.mxu0 %v40
  %316 = vmatpush.msra.mxu0 %v39
  %317 = vmatpush.msra.mxu0 %v38
  %318 = vmatpush.msra.mxu0 %v37
  %319 = vmatmul.f32.gmra.mxu0 %v254
  %v320 = vpop.f32.mrf.mxu0
  %v321 = vadd.f32 0.0, %v320
  %322 = vdwg.mxu0
  %v323 = vadd.f32 %v301, %v321
  %v324 = vxor.u32 %v323, 2147483648
  %v325 = vmul.f32 %v324, 1.442695
  %v326 = vpow.pop %v325
  %v327 = vadd.f32 %v326, 1.0
  %v328 = vrcp.pop %v327
  %v329 = vmul.f32 %v327, %v328
  %v330 = vsub.f32 1.0, %v329
  %v331 = vmul.f32 %v328, %v330
  %v332 = vadd.f32 %v328, %v331
  %vm333 = vweird.f32 %v327
  %vm334 = vweird.f32 %v328
  %vm335 = vmor %vm333, %vm334
  %v336 = vsel %vm335, %v328, %v332
  %v337 = vand.u32 2147483647, %v327
  %vm338 = vcmp.eq.f32.partialorder %v337, 8.507059e+37
  %v339 = vand.u32 %v327, 2147483648
  %v340 = vor.u32 1.1754944e-38, %v339
  %v341 = vsel %vm338, %v340, %v336
  %v342 = vmul.f32 1.0, %v341
  %v343 = vtanh.pop %v323
  %v344 = vmul.f32 %v342, %v244
  %346 = vrot.lane.b32.xlu0 %v343, 32
  %v347 = vpop.permute.xlu0 %346
  %v349 = vmul.f32 %v342, %v347
  %351 = vrot.lane.b32.xlu0 %v349, 32
  %v352 = vpop.permute.xlu0 %351
  %v354 = vadd.f32 %v344, %v352
  %v355 = vtanh.pop %v354
  %357 = vrot.lane.b32.xlu0 %v355, 32
  %v358 = vpop.permute.xlu0 %357
  %v360 = vmul.f32 %v342, %v358
  %362 = vrot.lane.b32.xlu0 %v360, 64
  %v363 = vpop.permute.xlu0 %362
  %v364 = vsel %vm77, %v363, 0
  %366 = vmatpush.msra.mxu0 0.0
  %367 = vmatpush.msra.mxu0 0.0
  %368 = vmatpush.msra.mxu0 0.0
  %369 = vmatpush.msra.mxu0 0.0
  %370 = vmatpush.msra.mxu0 0.0
  %371 = vmatpush.msra.mxu0 0.0
  %372 = vmatpush.msra.mxu0 0.0
  %373 = vmatpush.msra.mxu0 0.0
  %374 = vmatpush.msra.mxu0 0.0
  %375 = vmatpush.msra.mxu0 0.0
  %376 = vmatpush.msra.mxu0 0.0
  %377 = vmatpush.msra.mxu0 0.0
  %378 = vmatpush.msra.mxu0 %v47
  %379 = vmatpush.msra.mxu0 %v46
  %380 = vmatpush.msra.mxu0 %v45
  %381 = vmatpush.msra.mxu0 %v44
  %382 = vmatmul.f32.gmra.mxu0 %v364
  %v383 = vpop.f32.mrf.mxu0
  %v384 = vadd.f32 %v140, %v383
  %385 = vdwg.mxu0
  %s386 = scalar_lea.vmem [#allocation2], 4
  %387 = vst [vmem:[%s386] sm:$0x3] %v384
  %s388 = scalar_lea.vmem %s0, 6
  %v389 = vld [vmem:[%s388] sm:$0x3]
  %v391 = vsel %vm53, %v389, 0
  %393 = vmatpush.msra.mxu0 0.0
  %394 = vmatpush.msra.mxu0 0.0
  %395 = vmatpush.msra.mxu0 0.0
  %396 = vmatpush.msra.mxu0 0.0
  %397 = vmatpush.msra.mxu0 0.0
  %398 = vmatpush.msra.mxu0 0.0
  %399 = vmatpush.msra.mxu0 0.0
  %400 = vmatpush.msra.mxu0 0.0
  %401 = vmatpush.msra.mxu0 0.0
  %402 = vmatpush.msra.mxu0 0.0
  %403 = vmatpush.msra.mxu0 0.0
  %404 = vmatpush.msra.mxu0 0.0
  %405 = vmatpush.msra.mxu0 0.0
  %406 = vmatpush.msra.mxu0 0.0
  %407 = vmatpush.msra.mxu0 %v42
  %408 = vmatpush.msra.mxu0 %v41
  %409 = vmatmul.f32.gmra.mxu0 %v391
  %v410 = vpop.f32.mrf.mxu0
  %v411 = vadd.f32 %v51, %v410
  %412 = vdwg.mxu0
  %413 = vmatpush.msra.mxu0 0.0
  %414 = vmatpush.msra.mxu0 0.0
  %415 = vmatpush.msra.mxu0 0.0
  %416 = vmatpush.msra.mxu0 0.0
  %417 = vmatpush.msra.mxu0 0.0
  %418 = vmatpush.msra.mxu0 0.0
  %419 = vmatpush.msra.mxu0 0.0
  %420 = vmatpush.msra.mxu0 0.0
  %421 = vmatpush.msra.mxu0 0.0
  %422 = vmatpush.msra.mxu0 0.0
  %423 = vmatpush.msra.mxu0 0.0
  %424 = vmatpush.msra.mxu0 0.0
  %425 = vmatpush.msra.mxu0 %v40
  %426 = vmatpush.msra.mxu0 %v39
  %427 = vmatpush.msra.mxu0 %v38
  %428 = vmatpush.msra.mxu0 %v37
  %429 = vmatmul.f32.gmra.mxu0 %v364
  %v430 = vpop.f32.mrf.mxu0
  %v431 = vadd.f32 0.0, %v430
  %432 = vdwg.mxu0
  %v433 = vadd.f32 %v411, %v431
  %v434 = vxor.u32 %v433, 2147483648
  %v435 = vmul.f32 %v434, 1.442695
  %v436 = vpow.pop %v435
  %v437 = vadd.f32 %v436, 1.0
  %v438 = vrcp.pop %v437
  %v439 = vmul.f32 %v437, %v438
  %v440 = vsub.f32 1.0, %v439
  %v441 = vmul.f32 %v438, %v440
  %v442 = vadd.f32 %v438, %v441
  %vm443 = vweird.f32 %v437
  %vm444 = vweird.f32 %v438
  %vm445 = vmor %vm443, %vm444
  %v446 = vsel %vm445, %v438, %v442
  %v447 = vand.u32 2147483647, %v437
  %vm448 = vcmp.eq.f32.partialorder %v447, 8.507059e+37
  %v449 = vand.u32 %v437, 2147483648
  %v450 = vor.u32 1.1754944e-38, %v449
  %v451 = vsel %vm448, %v450, %v446
  %v452 = vmul.f32 1.0, %v451
  %v453 = vtanh.pop %v433
  %v454 = vmul.f32 %v452, %v354
  %456 = vrot.lane.b32.xlu0 %v453, 32
  %v457 = vpop.permute.xlu0 %456
  %v459 = vmul.f32 %v452, %v457
  %461 = vrot.lane.b32.xlu0 %v459, 32
  %v462 = vpop.permute.xlu0 %461
  %v464 = vadd.f32 %v454, %v462
  %v465 = vtanh.pop %v464
  %467 = vrot.lane.b32.xlu0 %v465, 32
  %v468 = vpop.permute.xlu0 %467
  %v470 = vmul.f32 %v452, %v468
  %472 = vrot.lane.b32.xlu0 %v470, 64
  %v473 = vpop.permute.xlu0 %472
  %v474 = vsel %vm77, %v473, 0
  %476 = vmatpush.msra.mxu0 0.0
  %477 = vmatpush.msra.mxu0 0.0
  %478 = vmatpush.msra.mxu0 0.0
  %479 = vmatpush.msra.mxu0 0.0
  %480 = vmatpush.msra.mxu0 0.0
  %481 = vmatpush.msra.mxu0 0.0
  %482 = vmatpush.msra.mxu0 0.0
  %483 = vmatpush.msra.mxu0 0.0
  %484 = vmatpush.msra.mxu0 0.0
  %485 = vmatpush.msra.mxu0 0.0
  %486 = vmatpush.msra.mxu0 0.0
  %487 = vmatpush.msra.mxu0 0.0
  %488 = vmatpush.msra.mxu0 %v47
  %489 = vmatpush.msra.mxu0 %v46
  %490 = vmatpush.msra.mxu0 %v45
  %491 = vmatpush.msra.mxu0 %v44
  %492 = vmatmul.f32.gmra.mxu0 %v474
  %v493 = vpop.f32.mrf.mxu0
  %v494 = vadd.f32 %v140, %v493
  %495 = vdwg.mxu0
  %s496 = scalar_lea.vmem [#allocation2], 6
  %497 = vst [vmem:[%s496] sm:$0x3] %v494
  %s498 = scalar_lea.vmem %s0, 8
  %v499 = vld [vmem:[%s498] sm:$0x3]
  %v501 = vsel %vm53, %v499, 0
  %503 = vmatpush.msra.mxu0 0.0
  %504 = vmatpush.msra.mxu0 0.0
  %505 = vmatpush.msra.mxu0 0.0
  %506 = vmatpush.msra.mxu0 0.0
  %507 = vmatpush.msra.mxu0 0.0
  %508 = vmatpush.msra.mxu0 0.0
  %509 = vmatpush.msra.mxu0 0.0
  %510 = vmatpush.msra.mxu0 0.0
  %511 = vmatpush.msra.mxu0 0.0
  %512 = vmatpush.msra.mxu0 0.0
  %513 = vmatpush.msra.mxu0 0.0
  %514 = vmatpush.msra.mxu0 0.0
  %515 = vmatpush.msra.mxu0 0.0
  %516 = vmatpush.msra.mxu0 0.0
  %517 = vmatpush.msra.mxu0 %v42
  %518 = vmatpush.msra.mxu0 %v41
  %519 = vmatmul.f32.gmra.mxu0 %v501
  %v520 = vpop.f32.mrf.mxu0
  %v521 = vadd.f32 %v51, %v520
  %522 = vdwg.mxu0
  %523 = vmatpush.msra.mxu0 0.0
  %524 = vmatpush.msra.mxu0 0.0
  %525 = vmatpush.msra.mxu0 0.0
  %526 = vmatpush.msra.mxu0 0.0
  %527 = vmatpush.msra.mxu0 0.0
  %528 = vmatpush.msra.mxu0 0.0
  %529 = vmatpush.msra.mxu0 0.0
  %530 = vmatpush.msra.mxu0 0.0
  %531 = vmatpush.msra.mxu0 0.0
  %532 = vmatpush.msra.mxu0 0.0
  %533 = vmatpush.msra.mxu0 0.0
  %534 = vmatpush.msra.mxu0 0.0
  %535 = vmatpush.msra.mxu0 %v40
  %536 = vmatpush.msra.mxu0 %v39
  %537 = vmatpush.msra.mxu0 %v38
  %538 = vmatpush.msra.mxu0 %v37
  %539 = vmatmul.f32.gmra.mxu0 %v474
  %v540 = vpop.f32.mrf.mxu0
  %v541 = vadd.f32 0.0, %v540
  %542 = vdwg.mxu0
  %v543 = vadd.f32 %v521, %v541
  %v544 = vxor.u32 %v543, 2147483648
  %v545 = vmul.f32 %v544, 1.442695
  %v546 = vpow.pop %v545
  %v547 = vadd.f32 %v546, 1.0
  %v548 = vrcp.pop %v547
  %v549 = vmul.f32 %v547, %v548
  %v550 = vsub.f32 1.0, %v549
  %v551 = vmul.f32 %v548, %v550
  %v552 = vadd.f32 %v548, %v551
  %vm553 = vweird.f32 %v547
  %vm554 = vweird.f32 %v548
  %vm555 = vmor %vm553, %vm554
  %v556 = vsel %vm555, %v548, %v552
  %v557 = vand.u32 2147483647, %v547
  %vm558 = vcmp.eq.f32.partialorder %v557, 8.507059e+37
  %v559 = vand.u32 %v547, 2147483648
  %v560 = vor.u32 1.1754944e-38, %v559
  %v561 = vsel %vm558, %v560, %v556
  %v562 = vmul.f32 1.0, %v561
  %v563 = vtanh.pop %v543
  %v564 = vmul.f32 %v562, %v464
  %566 = vrot.lane.b32.xlu0 %v563, 32
  %v567 = vpop.permute.xlu0 %566
  %v569 = vmul.f32 %v562, %v567
  %571 = vrot.lane.b32.xlu0 %v569, 32
  %v572 = vpop.permute.xlu0 %571
  %v574 = vadd.f32 %v564, %v572
  %v575 = vtanh.pop %v574
  %577 = vrot.lane.b32.xlu0 %v575, 32
  %v578 = vpop.permute.xlu0 %577
  %v580 = vmul.f32 %v562, %v578
  %582 = vrot.lane.b32.xlu0 %v580, 64
  %v583 = vpop.permute.xlu0 %582
  %v584 = vsel %vm77, %v583, 0
  %586 = vmatpush.msra.mxu0 0.0
  %587 = vmatpush.msra.mxu0 0.0
  %588 = vmatpush.msra.mxu0 0.0
  %589 = vmatpush.msra.mxu0 0.0
  %590 = vmatpush.msra.mxu0 0.0
  %591 = vmatpush.msra.mxu0 0.0
  %592 = vmatpush.msra.mxu0 0.0
  %593 = vmatpush.msra.mxu0 0.0
  %594 = vmatpush.msra.mxu0 0.0
  %595 = vmatpush.msra.mxu0 0.0
  %596 = vmatpush.msra.mxu0 0.0
  %597 = vmatpush.msra.mxu0 0.0
  %598 = vmatpush.msra.mxu0 %v47
  %599 = vmatpush.msra.mxu0 %v46
  %600 = vmatpush.msra.mxu0 %v45
  %601 = vmatpush.msra.mxu0 %v44
  %602 = vmatmul.f32.gmra.mxu0 %v584
  %v603 = vpop.f32.mrf.mxu0
  %v604 = vadd.f32 %v140, %v603
  %605 = vdwg.mxu0
  %s606 = scalar_lea.vmem [#allocation2], 8
  %607 = vst [vmem:[%s606] sm:$0x3] %v604
  %s608 = scalar_lea.vmem %s0, 10
  %v609 = vld [vmem:[%s608] sm:$0x3]
  %v611 = vsel %vm53, %v609, 0
  %613 = vmatpush.msra.mxu0 0.0
  %614 = vmatpush.msra.mxu0 0.0
  %615 = vmatpush.msra.mxu0 0.0
  %616 = vmatpush.msra.mxu0 0.0
  %617 = vmatpush.msra.mxu0 0.0
  %618 = vmatpush.msra.mxu0 0.0
  %619 = vmatpush.msra.mxu0 0.0
  %620 = vmatpush.msra.mxu0 0.0
  %621 = vmatpush.msra.mxu0 0.0
  %622 = vmatpush.msra.mxu0 0.0
  %623 = vmatpush.msra.mxu0 0.0
  %624 = vmatpush.msra.mxu0 0.0
  %625 = vmatpush.msra.mxu0 0.0
  %626 = vmatpush.msra.mxu0 0.0
  %627 = vmatpush.msra.mxu0 %v42
  %628 = vmatpush.msra.mxu0 %v41
  %629 = vmatmul.f32.gmra.mxu0 %v611
  %v630 = vpop.f32.mrf.mxu0
  %v631 = vadd.f32 %v51, %v630
  %632 = vdwg.mxu0
  %633 = vmatpush.msra.mxu0 0.0
  %634 = vmatpush.msra.mxu0 0.0
  %635 = vmatpush.msra.mxu0 0.0
  %636 = vmatpush.msra.mxu0 0.0
  %637 = vmatpush.msra.mxu0 0.0
  %638 = vmatpush.msra.mxu0 0.0
  %639 = vmatpush.msra.mxu0 0.0
  %640 = vmatpush.msra.mxu0 0.0
  %641 = vmatpush.msra.mxu0 0.0
  %642 = vmatpush.msra.mxu0 0.0
  %643 = vmatpush.msra.mxu0 0.0
  %644 = vmatpush.msra.mxu0 0.0
  %645 = vmatpush.msra.mxu0 %v40
  %646 = vmatpush.msra.mxu0 %v39
  %647 = vmatpush.msra.mxu0 %v38
  %648 = vmatpush.msra.mxu0 %v37
  %649 = vmatmul.f32.gmra.mxu0 %v584
  %v650 = vpop.f32.mrf.mxu0
  %v651 = vadd.f32 0.0, %v650
  %652 = vdwg.mxu0
  %v653 = vadd.f32 %v631, %v651
  %v654 = vxor.u32 %v653, 2147483648
  %v655 = vmul.f32 %v654, 1.442695
  %v656 = vpow.pop %v655
  %v657 = vadd.f32 %v656, 1.0
  %v658 = vrcp.pop %v657
  %v659 = vmul.f32 %v657, %v658
  %v660 = vsub.f32 1.0, %v659
  %v661 = vmul.f32 %v658, %v660
  %v662 = vadd.f32 %v658, %v661
  %vm663 = vweird.f32 %v657
  %vm664 = vweird.f32 %v658
  %vm665 = vmor %vm663, %vm664
  %v666 = vsel %vm665, %v658, %v662
  %v667 = vand.u32 2147483647, %v657
  %vm668 = vcmp.eq.f32.partialorder %v667, 8.507059e+37
  %v669 = vand.u32 %v657, 2147483648
  %v670 = vor.u32 1.1754944e-38, %v669
  %v671 = vsel %vm668, %v670, %v666
  %v672 = vmul.f32 1.0, %v671
  %v673 = vtanh.pop %v653
  %v674 = vmul.f32 %v672, %v574
  %676 = vrot.lane.b32.xlu0 %v673, 32
  %v677 = vpop.permute.xlu0 %676
  %v679 = vmul.f32 %v672, %v677
  %681 = vrot.lane.b32.xlu0 %v679, 32
  %v682 = vpop.permute.xlu0 %681
  %v684 = vadd.f32 %v674, %v682
  %v685 = vtanh.pop %v684
  %687 = vrot.lane.b32.xlu0 %v685, 32
  %v688 = vpop.permute.xlu0 %687
  %v690 = vmul.f32 %v672, %v688
  %692 = vrot.lane.b32.xlu0 %v690, 64
  %v693 = vpop.permute.xlu0 %692
  %v694 = vsel %vm77, %v693, 0
  %696 = vmatpush.msra.mxu0 0.0
  %697 = vmatpush.msra.mxu0 0.0
  %698 = vmatpush.msra.mxu0 0.0
  %699 = vmatpush.msra.mxu0 0.0
  %700 = vmatpush.msra.mxu0 0.0
  %701 = vmatpush.msra.mxu0 0.0
  %702 = vmatpush.msra.mxu0 0.0
  %703 = vmatpush.msra.mxu0 0.0
  %704 = vmatpush.msra.mxu0 0.0
  %705 = vmatpush.msra.mxu0 0.0
  %706 = vmatpush.msra.mxu0 0.0
  %707 = vmatpush.msra.mxu0 0.0
  %708 = vmatpush.msra.mxu0 %v47
  %709 = vmatpush.msra.mxu0 %v46
  %710 = vmatpush.msra.mxu0 %v45
  %711 = vmatpush.msra.mxu0 %v44
  %712 = vmatmul.f32.gmra.mxu0 %v694
  %v713 = vpop.f32.mrf.mxu0
  %v714 = vadd.f32 %v140, %v713
  %715 = vdwg.mxu0
  %s716 = scalar_lea.vmem [#allocation2], 10
  %717 = vst [vmem:[%s716] sm:$0x3] %v714
  %s718 = scalar_lea.vmem %s0, 12
  %v719 = vld [vmem:[%s718] sm:$0x3]
  %v721 = vsel %vm53, %v719, 0
  %723 = vmatpush.msra.mxu0 0.0
  %724 = vmatpush.msra.mxu0 0.0
  %725 = vmatpush.msra.mxu0 0.0
  %726 = vmatpush.msra.mxu0 0.0
  %727 = vmatpush.msra.mxu0 0.0
  %728 = vmatpush.msra.mxu0 0.0
  %729 = vmatpush.msra.mxu0 0.0
  %730 = vmatpush.msra.mxu0 0.0
  %731 = vmatpush.msra.mxu0 0.0
  %732 = vmatpush.msra.mxu0 0.0
  %733 = vmatpush.msra.mxu0 0.0
  %734 = vmatpush.msra.mxu0 0.0
  %735 = vmatpush.msra.mxu0 0.0
  %736 = vmatpush.msra.mxu0 0.0
  %737 = vmatpush.msra.mxu0 %v42
  %738 = vmatpush.msra.mxu0 %v41
  %739 = vmatmul.f32.gmra.mxu0 %v721
  %v740 = vpop.f32.mrf.mxu0
  %v741 = vadd.f32 %v51, %v740
  %742 = vdwg.mxu0
  %743 = vmatpush.msra.mxu0 0.0
  %744 = vmatpush.msra.mxu0 0.0
  %745 = vmatpush.msra.mxu0 0.0
  %746 = vmatpush.msra.mxu0 0.0
  %747 = vmatpush.msra.mxu0 0.0
  %748 = vmatpush.msra.mxu0 0.0
  %749 = vmatpush.msra.mxu0 0.0
  %750 = vmatpush.msra.mxu0 0.0
  %751 = vmatpush.msra.mxu0 0.0
  %752 = vmatpush.msra.mxu0 0.0
  %753 = vmatpush.msra.mxu0 0.0
  %754 = vmatpush.msra.mxu0 0.0
  %755 = vmatpush.msra.mxu0 %v40
  %756 = vmatpush.msra.mxu0 %v39
  %757 = vmatpush.msra.mxu0 %v38
  %758 = vmatpush.msra.mxu0 %v37
  %759 = vmatmul.f32.gmra.mxu0 %v694
  %v760 = vpop.f32.mrf.mxu0
  %v761 = vadd.f32 0.0, %v760
  %762 = vdwg.mxu0
  %v763 = vadd.f32 %v741, %v761
  %v764 = vxor.u32 %v763, 2147483648
  %v765 = vmul.f32 %v764, 1.442695
  %v766 = vpow.pop %v765
  %v767 = vadd.f32 %v766, 1.0
  %v768 = vrcp.pop %v767
  %v769 = vmul.f32 %v767, %v768
  %v770 = vsub.f32 1.0, %v769
  %v771 = vmul.f32 %v768, %v770
  %v772 = vadd.f32 %v768, %v771
  %vm773 = vweird.f32 %v767
  %vm774 = vweird.f32 %v768
  %vm775 = vmor %vm773, %vm774
  %v776 = vsel %vm775, %v768, %v772
  %v777 = vand.u32 2147483647, %v767
  %vm778 = vcmp.eq.f32.partialorder %v777, 8.507059e+37
  %v779 = vand.u32 %v767, 2147483648
  %v780 = vor.u32 1.1754944e-38, %v779
  %v781 = vsel %vm778, %v780, %v776
  %v782 = vmul.f32 1.0, %v781
  %v783 = vtanh.pop %v763
  %v784 = vmul.f32 %v782, %v684
  %786 = vrot.lane.b32.xlu0 %v783, 32
  %v787 = vpop.permute.xlu0 %786
  %v789 = vmul.f32 %v782, %v787
  %791 = vrot.lane.b32.xlu0 %v789, 32
  %v792 = vpop.permute.xlu0 %791
  %v794 = vadd.f32 %v784, %v792
  %v795 = vtanh.pop %v794
  %797 = vrot.lane.b32.xlu0 %v795, 32
  %v798 = vpop.permute.xlu0 %797
  %v800 = vmul.f32 %v782, %v798
  %802 = vrot.lane.b32.xlu0 %v800, 64
  %v803 = vpop.permute.xlu0 %802
  %v804 = vsel %vm77, %v803, 0
  %806 = vmatpush.msra.mxu0 0.0
  %807 = vmatpush.msra.mxu0 0.0
  %808 = vmatpush.msra.mxu0 0.0
  %809 = vmatpush.msra.mxu0 0.0
  %810 = vmatpush.msra.mxu0 0.0
  %811 = vmatpush.msra.mxu0 0.0
  %812 = vmatpush.msra.mxu0 0.0
  %813 = vmatpush.msra.mxu0 0.0
  %814 = vmatpush.msra.mxu0 0.0
  %815 = vmatpush.msra.mxu0 0.0
  %816 = vmatpush.msra.mxu0 0.0
  %817 = vmatpush.msra.mxu0 0.0
  %818 = vmatpush.msra.mxu0 %v47
  %819 = vmatpush.msra.mxu0 %v46
  %820 = vmatpush.msra.mxu0 %v45
  %821 = vmatpush.msra.mxu0 %v44
  %822 = vmatmul.f32.gmra.mxu0 %v804
  %v823 = vpop.f32.mrf.mxu0
  %v824 = vadd.f32 %v140, %v823
  %825 = vdwg.mxu0
  %s826 = scalar_lea.vmem [#allocation2], 12
  %827 = vst [vmem:[%s826] sm:$0x3] %v824
  %s828 = scalar_lea.vmem %s0, 14
  %v829 = vld [vmem:[%s828] sm:$0x3]
  %v831 = vsel %vm53, %v829, 0
  %833 = vmatpush.msra.mxu0 0.0
  %834 = vmatpush.msra.mxu0 0.0
  %835 = vmatpush.msra.mxu0 0.0
  %836 = vmatpush.msra.mxu0 0.0
  %837 = vmatpush.msra.mxu0 0.0
  %838 = vmatpush.msra.mxu0 0.0
  %839 = vmatpush.msra.mxu0 0.0
  %840 = vmatpush.msra.mxu0 0.0
  %841 = vmatpush.msra.mxu0 0.0
  %842 = vmatpush.msra.mxu0 0.0
  %843 = vmatpush.msra.mxu0 0.0
  %844 = vmatpush.msra.mxu0 0.0
  %845 = vmatpush.msra.mxu0 0.0
  %846 = vmatpush.msra.mxu0 0.0
  %847 = vmatpush.msra.mxu0 %v42
  %848 = vmatpush.msra.mxu0 %v41
  %849 = vmatmul.f32.gmra.mxu0 %v831
  %v850 = vpop.f32.mrf.mxu0
  %v851 = vadd.f32 %v51, %v850
  %852 = vdwg.mxu0
  %853 = vmatpush.msra.mxu0 0.0
  %854 = vmatpush.msra.mxu0 0.0
  %855 = vmatpush.msra.mxu0 0.0
  %856 = vmatpush.msra.mxu0 0.0
  %857 = vmatpush.msra.mxu0 0.0
  %858 = vmatpush.msra.mxu0 0.0
  %859 = vmatpush.msra.mxu0 0.0
  %860 = vmatpush.msra.mxu0 0.0
  %861 = vmatpush.msra.mxu0 0.0
  %862 = vmatpush.msra.mxu0 0.0
  %863 = vmatpush.msra.mxu0 0.0
  %864 = vmatpush.msra.mxu0 0.0
  %865 = vmatpush.msra.mxu0 %v40
  %866 = vmatpush.msra.mxu0 %v39
  %867 = vmatpush.msra.mxu0 %v38
  %868 = vmatpush.msra.mxu0 %v37
  %869 = vmatmul.f32.gmra.mxu0 %v804
  %v870 = vpop.f32.mrf.mxu0
  %v871 = vadd.f32 0.0, %v870
  %872 = vdwg.mxu0
  %v873 = vadd.f32 %v851, %v871
  %v874 = vxor.u32 %v873, 2147483648
  %v875 = vmul.f32 %v874, 1.442695
  %v876 = vpow.pop %v875
  %v877 = vadd.f32 %v876, 1.0
  %v878 = vrcp.pop %v877
  %v879 = vmul.f32 %v877, %v878
  %v880 = vsub.f32 1.0, %v879
  %v881 = vmul.f32 %v878, %v880
  %v882 = vadd.f32 %v878, %v881
  %vm883 = vweird.f32 %v877
  %vm884 = vweird.f32 %v878
  %vm885 = vmor %vm883, %vm884
  %v886 = vsel %vm885, %v878, %v882
  %v887 = vand.u32 2147483647, %v877
  %vm888 = vcmp.eq.f32.partialorder %v887, 8.507059e+37
  %v889 = vand.u32 %v877, 2147483648
  %v890 = vor.u32 1.1754944e-38, %v889
  %v891 = vsel %vm888, %v890, %v886
  %v892 = vmul.f32 1.0, %v891
  %v893 = vtanh.pop %v873
  %v894 = vmul.f32 %v892, %v794
  %896 = vrot.lane.b32.xlu0 %v893, 32
  %v897 = vpop.permute.xlu0 %896
  %v899 = vmul.f32 %v892, %v897
  %901 = vrot.lane.b32.xlu0 %v899, 32
  %v902 = vpop.permute.xlu0 %901
  %v904 = vadd.f32 %v894, %v902
  %v905 = vtanh.pop %v904
  %907 = vrot.lane.b32.xlu0 %v905, 32
  %v908 = vpop.permute.xlu0 %907
  %v910 = vmul.f32 %v892, %v908
  %912 = vrot.lane.b32.xlu0 %v910, 64
  %v913 = vpop.permute.xlu0 %912
  %v914 = vsel %vm77, %v913, 0
  %916 = vmatpush.msra.mxu0 0.0
  %917 = vmatpush.msra.mxu0 0.0
  %918 = vmatpush.msra.mxu0 0.0
  %919 = vmatpush.msra.mxu0 0.0
  %920 = vmatpush.msra.mxu0 0.0
  %921 = vmatpush.msra.mxu0 0.0
  %922 = vmatpush.msra.mxu0 0.0
  %923 = vmatpush.msra.mxu0 0.0
  %924 = vmatpush.msra.mxu0 0.0
  %925 = vmatpush.msra.mxu0 0.0
  %926 = vmatpush.msra.mxu0 0.0
  %927 = vmatpush.msra.mxu0 0.0
  %928 = vmatpush.msra.mxu0 %v47
  %929 = vmatpush.msra.mxu0 %v46
  %930 = vmatpush.msra.mxu0 %v45
  %931 = vmatpush.msra.mxu0 %v44
  %932 = vmatmul.f32.gmra.mxu0 %v914
  %v933 = vpop.f32.mrf.mxu0
  %v934 = vadd.f32 %v140, %v933
  %935 = vdwg.mxu0
  %s936 = scalar_lea.vmem [#allocation2], 14
  %937 = vst [vmem:[%s936] sm:$0x3] %v934
  %v938 = vld [vmem:[%s5] sm:$0xff]
  %v939 = vld [vmem:[%s5 + $0x8] sm:$0xff]
  %v940 = vld [vmem:[%s5 + $0x10] sm:$0xff]
  %v941 = vld [vmem:[%s5 + $0x18] sm:$0xff]
  %v942 = vld [vmem:[#allocation2] sm:$0x3]
  %943 = vmatpush.msra.mxu0 0.0
  %944 = vmatpush.msra.mxu0 0.0
  %945 = vmatpush.msra.mxu0 0.0
  %946 = vmatpush.msra.mxu0 0.0
  %947 = vmatpush.msra.mxu0 0.0
  %948 = vmatpush.msra.mxu0 0.0
  %949 = vmatpush.msra.mxu0 0.0
  %950 = vmatpush.msra.mxu0 0.0
  %951 = vmatpush.msra.mxu0 0.0
  %952 = vmatpush.msra.mxu0 0.0
  %953 = vmatpush.msra.mxu0 0.0
  %954 = vmatpush.msra.mxu0 0.0
  %955 = vmatpush.msra.mxu0 %v941
  %956 = vmatpush.msra.mxu0 %v940
  %957 = vmatpush.msra.mxu0 %v939
  %958 = vmatpush.msra.mxu0 %v938
  %959 = vmatmul.f32.gmra.mxu0 %v79
  %v960 = vpop.f32.mrf.mxu0
  %v961 = vadd.f32 0.0, %v960
  %962 = vdwg.mxu0
  %v963 = vadd.f32 %v942, %v961
  %v964 = vxor.u32 %v963, 2147483648
  %v965 = vmul.f32 %v964, 1.442695
  %v966 = vpow.pop %v965
  %v967 = vadd.f32 %v966, 1.0
  %v968 = vrcp.pop %v967
  %v969 = vmul.f32 %v967, %v968
  %v970 = vsub.f32 1.0, %v969
  %v971 = vmul.f32 %v968, %v970
  %v972 = vadd.f32 %v968, %v971
  %vm973 = vweird.f32 %v967
  %vm974 = vweird.f32 %v968
  %vm975 = vmor %vm973, %vm974
  %v976 = vsel %vm975, %v968, %v972
  %v977 = vand.u32 2147483647, %v967
  %vm978 = vcmp.eq.f32.partialorder %v977, 8.507059e+37
  %v979 = vand.u32 %v967, 2147483648
  %v980 = vor.u32 1.1754944e-38, %v979
  %v981 = vsel %vm978, %v980, %v976
  %v982 = vmul.f32 1.0, %v981
  %v983 = vtanh.pop %v963
  %v984 = vmul.f32 %v982, 0.0
  %986 = vrot.lane.b32.xlu0 %v983, 32
  %v987 = vpop.permute.xlu0 %986
  %v989 = vmul.f32 %v982, %v987
  %991 = vrot.lane.b32.xlu0 %v989, 32
  %v992 = vpop.permute.xlu0 %991
  %v994 = vadd.f32 %v984, %v992
  %v995 = vtanh.pop %v994
  %997 = vrot.lane.b32.xlu0 %v995, 32
  %v998 = vpop.permute.xlu0 %997
  %v1000 = vmul.f32 %v982, %v998
  %v1002 = vperm.slane %v36, 0
  %1005 = vrot.lane.b32.xlu0 %v1000, 64
  %v1006 = vpop.permute.xlu0 %1005
  %v1007 = vsel %vm77, %v1006, 0
  %1009 = vmatpush.msra.mxu0 0.0
  %1010 = vmatpush.msra.mxu0 0.0
  %1011 = vmatpush.msra.mxu0 0.0
  %1012 = vmatpush.msra.mxu0 0.0
  %1013 = vmatpush.msra.mxu0 0.0
  %1014 = vmatpush.msra.mxu0 0.0
  %1015 = vmatpush.msra.mxu0 0.0
  %1016 = vmatpush.msra.mxu0 0.0
  %1017 = vmatpush.msra.mxu0 0.0
  %1018 = vmatpush.msra.mxu0 0.0
  %1019 = vmatpush.msra.mxu0 0.0
  %1020 = vmatpush.msra.mxu0 0.0
  %1021 = vmatpush.msra.mxu0 %v35
  %1022 = vmatpush.msra.mxu0 %v34
  %1023 = vmatpush.msra.mxu0 %v33
  %1024 = vmatpush.msra.mxu0 %v32
  %1025 = vmatmul.f32.gmra.mxu0 %v1007
  %v1026 = vpop.f32.mrf.mxu0
  %v1027 = vadd.f32 %v1002, %v1026
  %1028 = vdwg.mxu0
  %1029 = vst [vmem:[%s9] sm:$0x3] %v1027
  %v1030 = vld [vmem:[%s276] sm:$0x3]
  %1031 = vmatpush.msra.mxu0 0.0
  %1032 = vmatpush.msra.mxu0 0.0
  %1033 = vmatpush.msra.mxu0 0.0
  %1034 = vmatpush.msra.mxu0 0.0
  %1035 = vmatpush.msra.mxu0 0.0
  %1036 = vmatpush.msra.mxu0 0.0
  %1037 = vmatpush.msra.mxu0 0.0
  %1038 = vmatpush.msra.mxu0 0.0
  %1039 = vmatpush.msra.mxu0 0.0
  %1040 = vmatpush.msra.mxu0 0.0
  %1041 = vmatpush.msra.mxu0 0.0
  %1042 = vmatpush.msra.mxu0 0.0
  %1043 = vmatpush.msra.mxu0 %v941
  %1044 = vmatpush.msra.mxu0 %v940
  %1045 = vmatpush.msra.mxu0 %v939
  %1046 = vmatpush.msra.mxu0 %v938
  %1047 = vmatmul.f32.gmra.mxu0 %v1007
  %v1048 = vpop.f32.mrf.mxu0
  %v1049 = vadd.f32 0.0, %v1048
  %1050 = vdwg.mxu0
  %v1051 = vadd.f32 %v1030, %v1049
  %v1052 = vxor.u32 %v1051, 2147483648
  %v1053 = vmul.f32 %v1052, 1.442695
  %v1054 = vpow.pop %v1053
  %v1055 = vadd.f32 %v1054, 1.0
  %v1056 = vrcp.pop %v1055
  %v1057 = vmul.f32 %v1055, %v1056
  %v1058 = vsub.f32 1.0, %v1057
  %v1059 = vmul.f32 %v1056, %v1058
  %v1060 = vadd.f32 %v1056, %v1059
  %vm1061 = vweird.f32 %v1055
  %vm1062 = vweird.f32 %v1056
  %vm1063 = vmor %vm1061, %vm1062
  %v1064 = vsel %vm1063, %v1056, %v1060
  %v1065 = vand.u32 2147483647, %v1055
  %vm1066 = vcmp.eq.f32.partialorder %v1065, 8.507059e+37
  %v1067 = vand.u32 %v1055, 2147483648
  %v1068 = vor.u32 1.1754944e-38, %v1067
  %v1069 = vsel %vm1066, %v1068, %v1064
  %v1070 = vmul.f32 1.0, %v1069
  %v1071 = vtanh.pop %v1051
  %v1072 = vmul.f32 %v1070, %v994
  %1074 = vrot.lane.b32.xlu0 %v1071, 32
  %v1075 = vpop.permute.xlu0 %1074
  %v1077 = vmul.f32 %v1070, %v1075
  %1079 = vrot.lane.b32.xlu0 %v1077, 32
  %v1080 = vpop.permute.xlu0 %1079
  %v1082 = vadd.f32 %v1072, %v1080
  %v1083 = vtanh.pop %v1082
  %1085 = vrot.lane.b32.xlu0 %v1083, 32
  %v1086 = vpop.permute.xlu0 %1085
  %v1088 = vmul.f32 %v1070, %v1086
  %1090 = vrot.lane.b32.xlu0 %v1088, 64
  %v1091 = vpop.permute.xlu0 %1090
  %v1092 = vsel %vm77, %v1091, 0
  %1094 = vmatpush.msra.mxu0 0.0
  %1095 = vmatpush.msra.mxu0 0.0
  %1096 = vmatpush.msra.mxu0 0.0
  %1097 = vmatpush.msra.mxu0 0.0
  %1098 = vmatpush.msra.mxu0 0.0
  %1099 = vmatpush.msra.mxu0 0.0
  %1100 = vmatpush.msra.mxu0 0.0
  %1101 = vmatpush.msra.mxu0 0.0
  %1102 = vmatpush.msra.mxu0 0.0
  %1103 = vmatpush.msra.mxu0 0.0
  %1104 = vmatpush.msra.mxu0 0.0
  %1105 = vmatpush.msra.mxu0 0.0
  %1106 = vmatpush.msra.mxu0 %v35
  %1107 = vmatpush.msra.mxu0 %v34
  %1108 = vmatpush.msra.mxu0 %v33
  %1109 = vmatpush.msra.mxu0 %v32
  %1110 = vmatmul.f32.gmra.mxu0 %v1092
  %v1111 = vpop.f32.mrf.mxu0
  %v1112 = vadd.f32 %v1002, %v1111
  %1113 = vdwg.mxu0
  %s1114 = scalar_lea.vmem %s9, 2
  %1115 = vst [vmem:[%s1114] sm:$0x3] %v1112
  %v1116 = vld [vmem:[%s386] sm:$0x3]
  %1117 = vmatpush.msra.mxu0 0.0
  %1118 = vmatpush.msra.mxu0 0.0
  %1119 = vmatpush.msra.mxu0 0.0
  %1120 = vmatpush.msra.mxu0 0.0
  %1121 = vmatpush.msra.mxu0 0.0
  %1122 = vmatpush.msra.mxu0 0.0
  %1123 = vmatpush.msra.mxu0 0.0
  %1124 = vmatpush.msra.mxu0 0.0
  %1125 = vmatpush.msra.mxu0 0.0
  %1126 = vmatpush.msra.mxu0 0.0
  %1127 = vmatpush.msra.mxu0 0.0
  %1128 = vmatpush.msra.mxu0 0.0
  %1129 = vmatpush.msra.mxu0 %v941
  %1130 = vmatpush.msra.mxu0 %v940
  %1131 = vmatpush.msra.mxu0 %v939
  %1132 = vmatpush.msra.mxu0 %v938
  %1133 = vmatmul.f32.gmra.mxu0 %v1092
  %v1134 = vpop.f32.mrf.mxu0
  %v1135 = vadd.f32 0.0, %v1134
  %1136 = vdwg.mxu0
  %v1137 = vadd.f32 %v1116, %v1135
  %v1138 = vxor.u32 %v1137, 2147483648
  %v1139 = vmul.f32 %v1138, 1.442695
  %v1140 = vpow.pop %v1139
  %v1141 = vadd.f32 %v1140, 1.0
  %v1142 = vrcp.pop %v1141
  %v1143 = vmul.f32 %v1141, %v1142
  %v1144 = vsub.f32 1.0, %v1143
  %v1145 = vmul.f32 %v1142, %v1144
  %v1146 = vadd.f32 %v1142, %v1145
  %vm1147 = vweird.f32 %v1141
  %vm1148 = vweird.f32 %v1142
  %vm1149 = vmor %vm1147, %vm1148
  %v1150 = vsel %vm1149, %v1142, %v1146
  %v1151 = vand.u32 2147483647, %v1141
  %vm1152 = vcmp.eq.f32.partialorder %v1151, 8.507059e+37
  %v1153 = vand.u32 %v1141, 2147483648
  %v1154 = vor.u32 1.1754944e-38, %v1153
  %v1155 = vsel %vm1152, %v1154, %v1150
  %v1156 = vmul.f32 1.0, %v1155
  %v1157 = vtanh.pop %v1137
  %v1158 = vmul.f32 %v1156, %v1082
  %1160 = vrot.lane.b32.xlu0 %v1157, 32
  %v1161 = vpop.permute.xlu0 %1160
  %v1163 = vmul.f32 %v1156, %v1161
  %1165 = vrot.lane.b32.xlu0 %v1163, 32
  %v1166 = vpop.permute.xlu0 %1165
  %v1168 = vadd.f32 %v1158, %v1166
  %v1169 = vtanh.pop %v1168
  %1171 = vrot.lane.b32.xlu0 %v1169, 32
  %v1172 = vpop.permute.xlu0 %1171
  %v1174 = vmul.f32 %v1156, %v1172
  %1176 = vrot.lane.b32.xlu0 %v1174, 64
  %v1177 = vpop.permute.xlu0 %1176
  %v1178 = vsel %vm77, %v1177, 0
  %1180 = vmatpush.msra.mxu0 0.0
  %1181 = vmatpush.msra.mxu0 0.0
  %1182 = vmatpush.msra.mxu0 0.0
  %1183 = vmatpush.msra.mxu0 0.0
  %1184 = vmatpush.msra.mxu0 0.0
  %1185 = vmatpush.msra.mxu0 0.0
  %1186 = vmatpush.msra.mxu0 0.0
  %1187 = vmatpush.msra.mxu0 0.0
  %1188 = vmatpush.msra.mxu0 0.0
  %1189 = vmatpush.msra.mxu0 0.0
  %1190 = vmatpush.msra.mxu0 0.0
  %1191 = vmatpush.msra.mxu0 0.0
  %1192 = vmatpush.msra.mxu0 %v35
  %1193 = vmatpush.msra.mxu0 %v34
  %1194 = vmatpush.msra.mxu0 %v33
  %1195 = vmatpush.msra.mxu0 %v32
  %1196 = vmatmul.f32.gmra.mxu0 %v1178
  %v1197 = vpop.f32.mrf.mxu0
  %v1198 = vadd.f32 %v1002, %v1197
  %1199 = vdwg.mxu0
  %s1200 = scalar_lea.vmem %s9, 4
  %1201 = vst [vmem:[%s1200] sm:$0x3] %v1198
  %v1202 = vld [vmem:[%s496] sm:$0x3]
  %1203 = vmatpush.msra.mxu0 0.0
  %1204 = vmatpush.msra.mxu0 0.0
  %1205 = vmatpush.msra.mxu0 0.0
  %1206 = vmatpush.msra.mxu0 0.0
  %1207 = vmatpush.msra.mxu0 0.0
  %1208 = vmatpush.msra.mxu0 0.0
  %1209 = vmatpush.msra.mxu0 0.0
  %1210 = vmatpush.msra.mxu0 0.0
  %1211 = vmatpush.msra.mxu0 0.0
  %1212 = vmatpush.msra.mxu0 0.0
  %1213 = vmatpush.msra.mxu0 0.0
  %1214 = vmatpush.msra.mxu0 0.0
  %1215 = vmatpush.msra.mxu0 %v941
  %1216 = vmatpush.msra.mxu0 %v940
  %1217 = vmatpush.msra.mxu0 %v939
  %1218 = vmatpush.msra.mxu0 %v938
  %1219 = vmatmul.f32.gmra.mxu0 %v1178
  %v1220 = vpop.f32.mrf.mxu0
  %v1221 = vadd.f32 0.0, %v1220
  %1222 = vdwg.mxu0
  %v1223 = vadd.f32 %v1202, %v1221
  %v1224 = vxor.u32 %v1223, 2147483648
  %v1225 = vmul.f32 %v1224, 1.442695
  %v1226 = vpow.pop %v1225
  %v1227 = vadd.f32 %v1226, 1.0
  %v1228 = vrcp.pop %v1227
  %v1229 = vmul.f32 %v1227, %v1228
  %v1230 = vsub.f32 1.0, %v1229
  %v1231 = vmul.f32 %v1228, %v1230
  %v1232 = vadd.f32 %v1228, %v1231
  %vm1233 = vweird.f32 %v1227
  %vm1234 = vweird.f32 %v1228
  %vm1235 = vmor %vm1233, %vm1234
  %v1236 = vsel %vm1235, %v1228, %v1232
  %v1237 = vand.u32 2147483647, %v1227
  %vm1238 = vcmp.eq.f32.partialorder %v1237, 8.507059e+37
  %v1239 = vand.u32 %v1227, 2147483648
  %v1240 = vor.u32 1.1754944e-38, %v1239
  %v1241 = vsel %vm1238, %v1240, %v1236
  %v1242 = vmul.f32 1.0, %v1241
  %v1243 = vtanh.pop %v1223
  %v1244 = vmul.f32 %v1242, %v1168
  %1246 = vrot.lane.b32.xlu0 %v1243, 32
  %v1247 = vpop.permute.xlu0 %1246
  %v1249 = vmul.f32 %v1242, %v1247
  %1251 = vrot.lane.b32.xlu0 %v1249, 32
  %v1252 = vpop.permute.xlu0 %1251
  %v1254 = vadd.f32 %v1244, %v1252
  %v1255 = vtanh.pop %v1254
  %1257 = vrot.lane.b32.xlu0 %v1255, 32
  %v1258 = vpop.permute.xlu0 %1257
  %v1260 = vmul.f32 %v1242, %v1258
  %1262 = vrot.lane.b32.xlu0 %v1260, 64
  %v1263 = vpop.permute.xlu0 %1262
  %v1264 = vsel %vm77, %v1263, 0
  %1266 = vmatpush.msra.mxu0 0.0
  %1267 = vmatpush.msra.mxu0 0.0
  %1268 = vmatpush.msra.mxu0 0.0
  %1269 = vmatpush.msra.mxu0 0.0
  %1270 = vmatpush.msra.mxu0 0.0
  %1271 = vmatpush.msra.mxu0 0.0
  %1272 = vmatpush.msra.mxu0 0.0
  %1273 = vmatpush.msra.mxu0 0.0
  %1274 = vmatpush.msra.mxu0 0.0
  %1275 = vmatpush.msra.mxu0 0.0
  %1276 = vmatpush.msra.mxu0 0.0
  %1277 = vmatpush.msra.mxu0 0.0
  %1278 = vmatpush.msra.mxu0 %v35
  %1279 = vmatpush.msra.mxu0 %v34
  %1280 = vmatpush.msra.mxu0 %v33
  %1281 = vmatpush.msra.mxu0 %v32
  %1282 = vmatmul.f32.gmra.mxu0 %v1264
  %v1283 = vpop.f32.mrf.mxu0
  %v1284 = vadd.f32 %v1002, %v1283
  %1285 = vdwg.mxu0
  %s1286 = scalar_lea.vmem %s9, 6
  %1287 = vst [vmem:[%s1286] sm:$0x3] %v1284
  %v1288 = vld [vmem:[%s606] sm:$0x3]
  %1289 = vmatpush.msra.mxu0 0.0
  %1290 = vmatpush.msra.mxu0 0.0
  %1291 = vmatpush.msra.mxu0 0.0
  %1292 = vmatpush.msra.mxu0 0.0
  %1293 = vmatpush.msra.mxu0 0.0
  %1294 = vmatpush.msra.mxu0 0.0
  %1295 = vmatpush.msra.mxu0 0.0
  %1296 = vmatpush.msra.mxu0 0.0
  %1297 = vmatpush.msra.mxu0 0.0
  %1298 = vmatpush.msra.mxu0 0.0
  %1299 = vmatpush.msra.mxu0 0.0
  %1300 = vmatpush.msra.mxu0 0.0
  %1301 = vmatpush.msra.mxu0 %v941
  %1302 = vmatpush.msra.mxu0 %v940
  %1303 = vmatpush.msra.mxu0 %v939
  %1304 = vmatpush.msra.mxu0 %v938
  %1305 = vmatmul.f32.gmra.mxu0 %v1264
  %v1306 = vpop.f32.mrf.mxu0
  %v1307 = vadd.f32 0.0, %v1306
  %1308 = vdwg.mxu0
  %v1309 = vadd.f32 %v1288, %v1307
  %v1310 = vxor.u32 %v1309, 2147483648
  %v1311 = vmul.f32 %v1310, 1.442695
  %v1312 = vpow.pop %v1311
  %v1313 = vadd.f32 %v1312, 1.0
  %v1314 = vrcp.pop %v1313
  %v1315 = vmul.f32 %v1313, %v1314
  %v1316 = vsub.f32 1.0, %v1315
  %v1317 = vmul.f32 %v1314, %v1316
  %v1318 = vadd.f32 %v1314, %v1317
  %vm1319 = vweird.f32 %v1313
  %vm1320 = vweird.f32 %v1314
  %vm1321 = vmor %vm1319, %vm1320
  %v1322 = vsel %vm1321, %v1314, %v1318
  %v1323 = vand.u32 2147483647, %v1313
  %vm1324 = vcmp.eq.f32.partialorder %v1323, 8.507059e+37
  %v1325 = vand.u32 %v1313, 2147483648
  %v1326 = vor.u32 1.1754944e-38, %v1325
  %v1327 = vsel %vm1324, %v1326, %v1322
  %v1328 = vmul.f32 1.0, %v1327
  %v1329 = vtanh.pop %v1309
  %v1330 = vmul.f32 %v1328, %v1254
  %1332 = vrot.lane.b32.xlu0 %v1329, 32
  %v1333 = vpop.permute.xlu0 %1332
  %v1335 = vmul.f32 %v1328, %v1333
  %1337 = vrot.lane.b32.xlu0 %v1335, 32
  %v1338 = vpop.permute.xlu0 %1337
  %v1340 = vadd.f32 %v1330, %v1338
  %v1341 = vtanh.pop %v1340
  %1343 = vrot.lane.b32.xlu0 %v1341, 32
  %v1344 = vpop.permute.xlu0 %1343
  %v1346 = vmul.f32 %v1328, %v1344
  %1348 = vrot.lane.b32.xlu0 %v1346, 64
  %v1349 = vpop.permute.xlu0 %1348
  %v1350 = vsel %vm77, %v1349, 0
  %1352 = vmatpush.msra.mxu0 0.0
  %1353 = vmatpush.msra.mxu0 0.0
  %1354 = vmatpush.msra.mxu0 0.0
  %1355 = vmatpush.msra.mxu0 0.0
  %1356 = vmatpush.msra.mxu0 0.0
  %1357 = vmatpush.msra.mxu0 0.0
  %1358 = vmatpush.msra.mxu0 0.0
  %1359 = vmatpush.msra.mxu0 0.0
  %1360 = vmatpush.msra.mxu0 0.0
  %1361 = vmatpush.msra.mxu0 0.0
  %1362 = vmatpush.msra.mxu0 0.0
  %1363 = vmatpush.msra.mxu0 0.0
  %1364 = vmatpush.msra.mxu0 %v35
  %1365 = vmatpush.msra.mxu0 %v34
  %1366 = vmatpush.msra.mxu0 %v33
  %1367 = vmatpush.msra.mxu0 %v32
  %1368 = vmatmul.f32.gmra.mxu0 %v1350
  %v1369 = vpop.f32.mrf.mxu0
  %v1370 = vadd.f32 %v1002, %v1369
  %1371 = vdwg.mxu0
  %s1372 = scalar_lea.vmem %s9, 8
  %1373 = vst [vmem:[%s1372] sm:$0x3] %v1370
  %v1374 = vld [vmem:[%s716] sm:$0x3]
  %1375 = vmatpush.msra.mxu0 0.0
  %1376 = vmatpush.msra.mxu0 0.0
  %1377 = vmatpush.msra.mxu0 0.0
  %1378 = vmatpush.msra.mxu0 0.0
  %1379 = vmatpush.msra.mxu0 0.0
  %1380 = vmatpush.msra.mxu0 0.0
  %1381 = vmatpush.msra.mxu0 0.0
  %1382 = vmatpush.msra.mxu0 0.0
  %1383 = vmatpush.msra.mxu0 0.0
  %1384 = vmatpush.msra.mxu0 0.0
  %1385 = vmatpush.msra.mxu0 0.0
  %1386 = vmatpush.msra.mxu0 0.0
  %1387 = vmatpush.msra.mxu0 %v941
  %1388 = vmatpush.msra.mxu0 %v940
  %1389 = vmatpush.msra.mxu0 %v939
  %1390 = vmatpush.msra.mxu0 %v938
  %1391 = vmatmul.f32.gmra.mxu0 %v1350
  %v1392 = vpop.f32.mrf.mxu0
  %v1393 = vadd.f32 0.0, %v1392
  %1394 = vdwg.mxu0
  %v1395 = vadd.f32 %v1374, %v1393
  %v1396 = vxor.u32 %v1395, 2147483648
  %v1397 = vmul.f32 %v1396, 1.442695
  %v1398 = vpow.pop %v1397
  %v1399 = vadd.f32 %v1398, 1.0
  %v1400 = vrcp.pop %v1399
  %v1401 = vmul.f32 %v1399, %v1400
  %v1402 = vsub.f32 1.0, %v1401
  %v1403 = vmul.f32 %v1400, %v1402
  %v1404 = vadd.f32 %v1400, %v1403
  %vm1405 = vweird.f32 %v1399
  %vm1406 = vweird.f32 %v1400
  %vm1407 = vmor %vm1405, %vm1406
  %v1408 = vsel %vm1407, %v1400, %v1404
  %v1409 = vand.u32 2147483647, %v1399
  %vm1410 = vcmp.eq.f32.partialorder %v1409, 8.507059e+37
  %v1411 = vand.u32 %v1399, 2147483648
  %v1412 = vor.u32 1.1754944e-38, %v1411
  %v1413 = vsel %vm1410, %v1412, %v1408
  %v1414 = vmul.f32 1.0, %v1413
  %v1415 = vtanh.pop %v1395
  %v1416 = vmul.f32 %v1414, %v1340
  %1418 = vrot.lane.b32.xlu0 %v1415, 32
  %v1419 = vpop.permute.xlu0 %1418
  %v1421 = vmul.f32 %v1414, %v1419
  %1423 = vrot.lane.b32.xlu0 %v1421, 32
  %v1424 = vpop.permute.xlu0 %1423
  %v1426 = vadd.f32 %v1416, %v1424
  %v1427 = vtanh.pop %v1426
  %1429 = vrot.lane.b32.xlu0 %v1427, 32
  %v1430 = vpop.permute.xlu0 %1429
  %v1432 = vmul.f32 %v1414, %v1430
  %1434 = vrot.lane.b32.xlu0 %v1432, 64
  %v1435 = vpop.permute.xlu0 %1434
  %v1436 = vsel %vm77, %v1435, 0
  %1438 = vmatpush.msra.mxu0 0.0
  %1439 = vmatpush.msra.mxu0 0.0
  %1440 = vmatpush.msra.mxu0 0.0
  %1441 = vmatpush.msra.mxu0 0.0
  %1442 = vmatpush.msra.mxu0 0.0
  %1443 = vmatpush.msra.mxu0 0.0
  %1444 = vmatpush.msra.mxu0 0.0
  %1445 = vmatpush.msra.mxu0 0.0
  %1446 = vmatpush.msra.mxu0 0.0
  %1447 = vmatpush.msra.mxu0 0.0
  %1448 = vmatpush.msra.mxu0 0.0
  %1449 = vmatpush.msra.mxu0 0.0
  %1450 = vmatpush.msra.mxu0 %v35
  %1451 = vmatpush.msra.mxu0 %v34
  %1452 = vmatpush.msra.mxu0 %v33
  %1453 = vmatpush.msra.mxu0 %v32
  %1454 = vmatmul.f32.gmra.mxu0 %v1436
  %v1455 = vpop.f32.mrf.mxu0
  %v1456 = vadd.f32 %v1002, %v1455
  %1457 = vdwg.mxu0
  %s1458 = scalar_lea.vmem %s9, 10
  %1459 = vst [vmem:[%s1458] sm:$0x3] %v1456
  %v1460 = vld [vmem:[%s826] sm:$0x3]
  %1461 = vmatpush.msra.mxu0 0.0
  %1462 = vmatpush.msra.mxu0 0.0
  %1463 = vmatpush.msra.mxu0 0.0
  %1464 = vmatpush.msra.mxu0 0.0
  %1465 = vmatpush.msra.mxu0 0.0
  %1466 = vmatpush.msra.mxu0 0.0
  %1467 = vmatpush.msra.mxu0 0.0
  %1468 = vmatpush.msra.mxu0 0.0
  %1469 = vmatpush.msra.mxu0 0.0
  %1470 = vmatpush.msra.mxu0 0.0
  %1471 = vmatpush.msra.mxu0 0.0
  %1472 = vmatpush.msra.mxu0 0.0
  %1473 = vmatpush.msra.mxu0 %v941
  %1474 = vmatpush.msra.mxu0 %v940
  %1475 = vmatpush.msra.mxu0 %v939
  %1476 = vmatpush.msra.mxu0 %v938
  %1477 = vmatmul.f32.gmra.mxu0 %v1436
  %v1478 = vpop.f32.mrf.mxu0
  %v1479 = vadd.f32 0.0, %v1478
  %1480 = vdwg.mxu0
  %v1481 = vadd.f32 %v1460, %v1479
  %v1482 = vxor.u32 %v1481, 2147483648
  %v1483 = vmul.f32 %v1482, 1.442695
  %v1484 = vpow.pop %v1483
  %v1485 = vadd.f32 %v1484, 1.0
  %v1486 = vrcp.pop %v1485
  %v1487 = vmul.f32 %v1485, %v1486
  %v1488 = vsub.f32 1.0, %v1487
  %v1489 = vmul.f32 %v1486, %v1488
  %v1490 = vadd.f32 %v1486, %v1489
  %vm1491 = vweird.f32 %v1485
  %vm1492 = vweird.f32 %v1486
  %vm1493 = vmor %vm1491, %vm1492
  %v1494 = vsel %vm1493, %v1486, %v1490
  %v1495 = vand.u32 2147483647, %v1485
  %vm1496 = vcmp.eq.f32.partialorder %v1495, 8.507059e+37
  %v1497 = vand.u32 %v1485, 2147483648
  %v1498 = vor.u32 1.1754944e-38, %v1497
  %v1499 = vsel %vm1496, %v1498, %v1494
  %v1500 = vmul.f32 1.0, %v1499
  %v1501 = vtanh.pop %v1481
  %v1502 = vmul.f32 %v1500, %v1426
  %1504 = vrot.lane.b32.xlu0 %v1501, 32
  %v1505 = vpop.permute.xlu0 %1504
  %v1507 = vmul.f32 %v1500, %v1505
  %1509 = vrot.lane.b32.xlu0 %v1507, 32
  %v1510 = vpop.permute.xlu0 %1509
  %v1512 = vadd.f32 %v1502, %v1510
  %v1513 = vtanh.pop %v1512
  %1515 = vrot.lane.b32.xlu0 %v1513, 32
  %v1516 = vpop.permute.xlu0 %1515
  %v1518 = vmul.f32 %v1500, %v1516
  %1520 = vrot.lane.b32.xlu0 %v1518, 64
  %v1521 = vpop.permute.xlu0 %1520
  %v1522 = vsel %vm77, %v1521, 0
  %1524 = vmatpush.msra.mxu0 0.0
  %1525 = vmatpush.msra.mxu0 0.0
  %1526 = vmatpush.msra.mxu0 0.0
  %1527 = vmatpush.msra.mxu0 0.0
  %1528 = vmatpush.msra.mxu0 0.0
  %1529 = vmatpush.msra.mxu0 0.0
  %1530 = vmatpush.msra.mxu0 0.0
  %1531 = vmatpush.msra.mxu0 0.0
  %1532 = vmatpush.msra.mxu0 0.0
  %1533 = vmatpush.msra.mxu0 0.0
  %1534 = vmatpush.msra.mxu0 0.0
  %1535 = vmatpush.msra.mxu0 0.0
  %1536 = vmatpush.msra.mxu0 %v35
  %1537 = vmatpush.msra.mxu0 %v34
  %1538 = vmatpush.msra.mxu0 %v33
  %1539 = vmatpush.msra.mxu0 %v32
  %1540 = vmatmul.f32.gmra.mxu0 %v1522
  %v1541 = vpop.f32.mrf.mxu0
  %v1542 = vadd.f32 %v1002, %v1541
  %1543 = vdwg.mxu0
  %s1544 = scalar_lea.vmem %s9, 12
  %1545 = vst [vmem:[%s1544] sm:$0x3] %v1542
  %v1546 = vld [vmem:[%s936] sm:$0x3]
  %1547 = vmatpush.msra.mxu0 0.0
  %1548 = vmatpush.msra.mxu0 0.0
  %1549 = vmatpush.msra.mxu0 0.0
  %1550 = vmatpush.msra.mxu0 0.0
  %1551 = vmatpush.msra.mxu0 0.0
  %1552 = vmatpush.msra.mxu0 0.0
  %1553 = vmatpush.msra.mxu0 0.0
  %1554 = vmatpush.msra.mxu0 0.0
  %1555 = vmatpush.msra.mxu0 0.0
  %1556 = vmatpush.msra.mxu0 0.0
  %1557 = vmatpush.msra.mxu0 0.0
  %1558 = vmatpush.msra.mxu0 0.0
  %1559 = vmatpush.msra.mxu0 %v941
  %1560 = vmatpush.msra.mxu0 %v940
  %1561 = vmatpush.msra.mxu0 %v939
  %1562 = vmatpush.msra.mxu0 %v938
  %1563 = vmatmul.f32.gmra.mxu0 %v1522
  %v1564 = vpop.f32.mrf.mxu0
  %v1565 = vadd.f32 0.0, %v1564
  %1566 = vdwg.mxu0
  %v1567 = vadd.f32 %v1546, %v1565
  %v1568 = vxor.u32 %v1567, 2147483648
  %v1569 = vmul.f32 %v1568, 1.442695
  %v1570 = vpow.pop %v1569
  %v1571 = vadd.f32 %v1570, 1.0
  %v1572 = vrcp.pop %v1571
  %v1573 = vmul.f32 %v1571, %v1572
  %v1574 = vsub.f32 1.0, %v1573
  %v1575 = vmul.f32 %v1572, %v1574
  %v1576 = vadd.f32 %v1572, %v1575
  %vm1577 = vweird.f32 %v1571
  %vm1578 = vweird.f32 %v1572
  %vm1579 = vmor %vm1577, %vm1578
  %v1580 = vsel %vm1579, %v1572, %v1576
  %v1581 = vand.u32 2147483647, %v1571
  %vm1582 = vcmp.eq.f32.partialorder %v1581, 8.507059e+37
  %v1583 = vand.u32 %v1571, 2147483648
  %v1584 = vor.u32 1.1754944e-38, %v1583
  %v1585 = vsel %vm1582, %v1584, %v1580
  %v1586 = vmul.f32 1.0, %v1585
  %v1587 = vtanh.pop %v1567
  %v1588 = vmul.f32 %v1586, %v1512
  %1590 = vrot.lane.b32.xlu0 %v1587, 32
  %v1591 = vpop.permute.xlu0 %1590
  %v1593 = vmul.f32 %v1586, %v1591
  %1595 = vrot.lane.b32.xlu0 %v1593, 32
  %v1596 = vpop.permute.xlu0 %1595
  %v1598 = vadd.f32 %v1588, %v1596
  %v1599 = vtanh.pop %v1598
  %1601 = vrot.lane.b32.xlu0 %v1599, 32
  %v1602 = vpop.permute.xlu0 %1601
  %v1604 = vmul.f32 %v1586, %v1602
  %1606 = vrot.lane.b32.xlu0 %v1604, 64
  %v1607 = vpop.permute.xlu0 %1606
  %v1608 = vsel %vm77, %v1607, 0
  %1610 = vmatpush.msra.mxu0 0.0
  %1611 = vmatpush.msra.mxu0 0.0
  %1612 = vmatpush.msra.mxu0 0.0
  %1613 = vmatpush.msra.mxu0 0.0
  %1614 = vmatpush.msra.mxu0 0.0
  %1615 = vmatpush.msra.mxu0 0.0
  %1616 = vmatpush.msra.mxu0 0.0
  %1617 = vmatpush.msra.mxu0 0.0
  %1618 = vmatpush.msra.mxu0 0.0
  %1619 = vmatpush.msra.mxu0 0.0
  %1620 = vmatpush.msra.mxu0 0.0
  %1621 = vmatpush.msra.mxu0 0.0
  %1622 = vmatpush.msra.mxu0 %v35
  %1623 = vmatpush.msra.mxu0 %v34
  %1624 = vmatpush.msra.mxu0 %v33
  %1625 = vmatpush.msra.mxu0 %v32
  %1626 = vmatmul.f32.gmra.mxu0 %v1608
  %v1627 = vpop.f32.mrf.mxu0
  %v1628 = vadd.f32 %v1002, %v1627
  %1629 = vdwg.mxu0
  %s1630 = scalar_lea.vmem %s9, 14
  %1631 = vst [vmem:[%s1630] sm:$0x3] %v1628
  // Predicated region
  $region38: #{lstm_model_forward.1} parent=0 // pred_check
    _
  $region39: #{lstm_model_forward.1} parent=0 // pred_check_branch
    %1633 = sbr.rel (0) target = $region41
  $region40: #{lstm_model_forward.1} parent=0 // pred_region
    _
  $region41: #{lstm_model_forward.1} parent=0 // pred_fallthru
    _
  // Predicated region
  $region42: #{lstm_model_forward.1} parent=0 // pred_check
    _
  $region43: #{lstm_model_forward.1} parent=0 // pred_check_branch
    %1635 = sbr.rel (0) target = $region45
  $region44: #{lstm_model_forward.1} parent=0 // pred_region
    _
  $region45: #{lstm_model_forward.1} parent=0 // pred_fallthru
    _

</llo_original>
